<compile_context>
chip_gen: v7x
topology: tpu7x:2x2x1
jax: 0.10.0
libtpu: 0.0.40
codegen_flags: <defaults>
</compile_context>

<pallas_src>
import jax
import jax.numpy as jnp
from jax import lax
from jax.experimental import pallas as pl
from jax.experimental.pallas import tpu as pltpu


def _softplus(z):
    # stable softplus using only max/abs/exp/log (safe Mosaic lowering)
    return jnp.maximum(z, 0.0) + jnp.log(1.0 + jnp.exp(-jnp.abs(z)))


# ----------------------------------------------------------------------------
# Kernel: full decoder rollout for one batch element.  grid = (batch,).
# ----------------------------------------------------------------------------
def _decoder_vis_kernel(
    # batch-varying inputs
    xin_ref, h0_ref,                        # [1,N,3], [1,N,F2]
    # step-invariant, pre-fused weights (resident in VMEM for the whole call)
    Wcat_in_ref, lin_in_b_ref,              # [3,3F2], [1,F2]
    Wcat_st_ref, conv_b_ref, Wcat_x_ref,    # [F2,2F2+2], [1,2], [F2,2+F2]
    W2T_ref, w1a_ref, w1b_ref,              # [2N,N], [F,N], [F,N]
    addb1_ref, addb2_ref,                   # [N,N], [N,N]  (bias + -1e16*(1-Adj))
    WrT_ref, r_b_ref, WuT_ref, u_b_ref,     # [N,N],[1,F2],[N,N],[1,F2]
    WcT_ref, lc_s_ref, c_b_ref,             # [N,N],[F2,F2],[1,F2]
    reg_w_ref, reg_b_ref,                   # [F2,4], [1,4]
    # outputs (whole rollout for this batch element)
    slab_ref, m1_ref, m2_ref,               # [T,1,N,8], [T,1,N,N], [T,1,N,N]
):
    f32 = jnp.float32
    N = xin_ref.shape[1]
    F2 = h0_ref.shape[2]
    T = m1_ref.shape[0]

    # -- hoist all weight loads / bias broadcasts out of the time loop --
    Wcat_in = Wcat_in_ref[...]
    Wcat_st = Wcat_st_ref[...]
    Wcat_x = Wcat_x_ref[...]
    W2T = W2T_ref[...]
    w1a = w1a_ref[...]
    w1b = w1b_ref[...]
    addb1 = addb1_ref[...]
    addb2 = addb2_ref[...]
    WrT = WrT_ref[...]
    WuT = WuT_ref[...]
    WcT = WcT_ref[...]
    lc_s = lc_s_ref[...]
    reg_w = reg_w_ref[...]
    lin_in_b = jnp.broadcast_to(lin_in_b_ref[...], (N, F2))
    conv_b = jnp.broadcast_to(conv_b_ref[...], (N, 2))
    r_b = jnp.broadcast_to(r_b_ref[...], (N, F2))
    u_b = jnp.broadcast_to(u_b_ref[...], (N, F2))
    c_b = jnp.broadcast_to(c_b_ref[...], (N, F2))
    reg_b = jnp.broadcast_to(reg_b_ref[...], (N, 4))

    def step(t, carry):
        inp, st = carry                       # [N,3] fed-back pred, [N,F2] state

        # fused: inp @ [lin_in_w | lin_r_w[:3] | lin_u_w[:3]]
        a1 = jnp.dot(inp, Wcat_in, preferred_element_type=f32)    # [N, 3F2]
        x = a1[:, :F2] + lin_in_b
        pr = a1[:, F2:2 * F2]
        pu = a1[:, 2 * F2:3 * F2]

        # fused: st @ [lin_r_w[3:] | lin_u_w[3:] | conv_w[F2:]]
        a2 = jnp.dot(st, Wcat_st, preferred_element_type=f32)     # [N, 2F2+2]
        pr = pr + a2[:, :F2]
        pu = pu + a2[:, F2:2 * F2]
        dem_st = a2[:, 2 * F2:]

        # fused: x @ [conv_w[:F2] | lin_c_w[:F2]]
        a3 = jnp.dot(x, Wcat_x, preferred_element_type=f32)       # [N, 2+F2]
        dem_x = a3[:, :2]
        projc_x = a3[:, 2:]

        demand = jnp.tanh(dem_x + dem_st + conv_b) * 0.5          # [N, 2]

        # ---- DoubleDGC masks, reassociated: (W2^T @ gru) @ w1 ----
        gru = jnp.concatenate([x, st], axis=-1)                   # [N, F]
        G = jnp.dot(W2T, gru, preferred_element_type=f32)         # [2N, F]
        logits1 = jnp.dot(G[:N], w1a, preferred_element_type=f32) + addb1
        logits2 = jnp.dot(G[N:], w1b, preferred_element_type=f32) + addb2
        e1 = jnp.exp(logits1 - jnp.max(logits1, axis=-1, keepdims=True))
        mask1 = e1 / jnp.sum(e1, axis=-1, keepdims=True)
        e2 = jnp.exp(logits2 - jnp.max(logits2, axis=-1, keepdims=True))
        mask2 = e2 / jnp.sum(e2, axis=-1, keepdims=True)

        # v = mask1 @ inp[:, :1], q = mask2 @ inp[:, 1:2]
        inp2 = inp[:, 0:2]
        vq1 = jnp.dot(mask1, inp2, preferred_element_type=f32)
        vq2 = jnp.dot(mask2, inp2, preferred_element_type=f32)
        col = lax.broadcasted_iota(jnp.int32, vq1.shape, 1)
        pred01 = jnp.where(col == 0, vq1, vq2) + demand            # [N, 2]

        # ---- GRU-style gates (LocalGC -> Linear, concat-free) ----
        r = jax.nn.sigmoid(jnp.dot(WrT, pr, preferred_element_type=f32) + r_b)
        u = jax.nn.sigmoid(jnp.dot(WuT, pu, preferred_element_type=f32) + u_b)
        s = r * st
        projc = projc_x + jnp.dot(s, lc_s, preferred_element_type=f32)
        c = jnp.tanh(jnp.dot(WcT, projc, preferred_element_type=f32) + c_b)
        H = u * st + (1.0 - u) * c                                  # [N, F2]

        # ---- uncertainty head ----
        Hr = jnp.dot(H, reg_w, preferred_element_type=f32) + reg_b  # [N, 4]
        mu = jax.nn.sigmoid(Hr[:, 3:4])
        a = _softplus(Hr[:, 0:1]) + 2.0
        b = _softplus(Hr[:, 1:2])
        vv = _softplus(Hr[:, 2:3] + 2.0)
        sigma = jnp.sqrt(b * (vv + 1.0) / (vv * (a - 1.0)))         # [N, 1]

        pred = jnp.concatenate([pred01, sigma], axis=-1)            # [N, 3]

        # per-step outputs accumulate in the VMEM output block; one HBM
        # writeback per batch element after the loop finishes
        slab_ref[t, 0] = jnp.concatenate(
            [mu, vv, a, b, pred01, sigma, demand[:, 1:2]], axis=-1)
        m1_ref[t, 0] = mask1
        m2_ref[t, 0] = mask2
        return (pred, H)

    lax.fori_loop(0, T, step, (xin_ref[0], h0_ref[0]))


_WKEYS = (
    "Wcat_in", "lin_in_b",
    "Wcat_st", "conv_b", "Wcat_x",
    "W2T", "w1a", "w1b", "addb1", "addb2",
    "WrT", "r_b", "WuT", "u_b",
    "WcT", "lc_s", "c_b",
    "reg_w", "reg_b",
)


# ----------------------------------------------------------------------------
# Host wrapper: single fused pallas_call over the batch axis only.
# ----------------------------------------------------------------------------
def decoder_vis_forward(prepped, x, init_state, nb_step):
    """x: [B, T, N, 2], init_state: [B, N, F//2].  Mirrors Decoder_vis.forward."""
    Bsz, _, N, _ = x.shape
    F2 = init_state.shape[-1]

    # xin = cat(x[:, 0], 0.01) — host glue as in the PyTorch reference
    tail = jnp.full((Bsz, N, 1), 0.01, dtype=jnp.float32)
    xin = jnp.concatenate([x[:, 0].astype(jnp.float32), tail], axis=-1)   # [B,N,3]

    weights = [prepped[k] for k in _WKEYS]

    def const_spec(arr):
        nd = arr.ndim
        return pl.BlockSpec(arr.shape, lambda b, _nd=nd: (0,) * _nd)

    in_specs = [
        pl.BlockSpec((1, N, 3), lambda b: (b, 0, 0)),
        pl.BlockSpec((1, N, F2), lambda b: (b, 0, 0)),
    ] + [const_spec(w) for w in weights]

    out_shape = (
        jax.ShapeDtypeStruct((nb_step, Bsz, N, 8), jnp.float32),  # [u(4)|p(3)|D(1)]
        jax.ShapeDtypeStruct((nb_step, Bsz, N, N), jnp.float32),  # mask1, [T,B,N,N]
        jax.ShapeDtypeStruct((nb_step, Bsz, N, N), jnp.float32),  # mask2, [T,B,N,N]
    )
    out_specs = (
        pl.BlockSpec((nb_step, 1, N, 8), lambda b: (0, b, 0, 0)),
        pl.BlockSpec((nb_step, 1, N, N), lambda b: (0, b, 0, 0)),
        pl.BlockSpec((nb_step, 1, N, N), lambda b: (0, b, 0, 0)),
    )

    slab, M1, M2 = pl.pallas_call(
        _decoder_vis_kernel,
        out_shape=out_shape,
        grid=(Bsz,),
        in_specs=in_specs,
        out_specs=out_specs,
        compiler_params=pltpu.CompilerParams(
            dimension_semantics=("parallel",)),
    )(xin, init_state.astype(jnp.float32), *weights)

    # host-side glue reproducing the torch stack/cat/squeeze.
    # Masks already come out in [T, B, N, N]; only the tiny slab is transposed.
    p = jnp.squeeze(jnp.transpose(slab[..., :7], (1, 0, 2, 3)))   # [B,T,N,7]
    D = jnp.squeeze(jnp.transpose(slab[..., 7], (1, 0, 2)))       # [B,T,N]
    M1 = jnp.squeeze(M1)
    M2 = jnp.squeeze(M2)
    return p, M1, M2, D


# ----------------------------------------------------------------------------
# Parameter construction (synthetic) and host-side pre-fusion of constants.
# ----------------------------------------------------------------------------
def init_raw_params(key, N, Fdim, A, Badj):
    F2 = Fdim // 2
    dim = F2 + 3
    ks = jax.random.split(key, 16)

    def xavier(k, shape):
        fan_in, fan_out = shape[-2], shape[-1]
        std = (2.0 / (fan_in + fan_out)) ** 0.5
        return std * jax.random.normal(k, shape, dtype=jnp.float32)

    def small(k, shape):
        return 0.1 * jax.random.normal(k, shape, dtype=jnp.float32)

    return {
        "A": A.astype(jnp.float32), "B": Badj.astype(jnp.float32),
        # DoubleDGC
        "w1": xavier(ks[0], (2, Fdim, N)),
        "w2": xavier(ks[1], (2, N, N)),
        "core_bias": jnp.zeros((2, N, 1), jnp.float32),
        "conv_w": xavier(ks[2], (Fdim, 2)), "conv_b": small(ks[3], (2,)),
        # lin_in (3 -> F/2)
        "lin_in_w": xavier(ks[4], (3, F2)), "lin_in_b": small(ks[5], (F2,)),
        # r gate
        "dgc_r_w": xavier(ks[6], (N, N)), "dgc_r_b": jnp.zeros((dim,), jnp.float32),
        "lin_r_w": xavier(ks[7], (dim, F2)), "lin_r_b": small(ks[8], (F2,)),
        # u gate
        "dgc_u_w": xavier(ks[9], (N, N)), "dgc_u_b": jnp.zeros((dim,), jnp.float32),
        "lin_u_w": xavier(ks[10], (dim, F2)), "lin_u_b": small(ks[11], (F2,)),
        # candidate
        "dgc_c_w": xavier(ks[12], (N, N)), "dgc_c_b": jnp.zeros((Fdim,), jnp.float32),
        "lin_c_w": xavier(ks[13], (Fdim, F2)), "lin_c_b": small(ks[14], (F2,)),
        # uncertainty head
        "lin_reg_w": xavier(ks[15], (F2, 4)), "lin_reg_b": jnp.zeros((4,), jnp.float32),
    }


def prepare_params(raw):
    """Fold/precompute everything constant across batch and time; fuse same-LHS weights."""
    A, Badj = raw["A"], raw["B"]
    F2 = raw["lin_in_w"].shape[1]
    prepped = {
        # inp @ [lin_in_w | lin_r_w[:3] | lin_u_w[:3]]
        "Wcat_in": jnp.concatenate(
            [raw["lin_in_w"], raw["lin_r_w"][:3], raw["lin_u_w"][:3]], axis=1),
        "lin_in_b": raw["lin_in_b"][None, :],
        # st @ [lin_r_w[3:] | lin_u_w[3:] | conv_w[F2:]]
        "Wcat_st": jnp.concatenate(
            [raw["lin_r_w"][3:], raw["lin_u_w"][3:], raw["conv_w"][F2:]], axis=1),
        "conv_b": raw["conv_b"][None, :],
        # x @ [conv_w[:F2] | lin_c_w[:F2]]
        "Wcat_x": jnp.concatenate(
            [raw["conv_w"][:F2], raw["lin_c_w"][:F2]], axis=1),
        # stacked first stage of both masks: [(A*w2[0]).T ; (B*w2[1]).T]
        "W2T": jnp.concatenate(
            [(A * raw["w2"][0]).T, (Badj * raw["w2"][1]).T], axis=0),
        "w1a": raw["w1"][0],
        "w1b": raw["w1"][1],
        "addb1": raw["core_bias"][0] + (-1e16) * (1.0 - A),
        "addb2": raw["core_bias"][1] + (-1e16) * (1.0 - Badj),
        "WrT": (A * raw["dgc_r_w"]).T,
        "r_b": (raw["dgc_r_b"] @ raw["lin_r_w"] + raw["lin_r_b"])[None, :],
        "WuT": (A * raw["dgc_u_w"]).T,
        "u_b": (raw["dgc_u_b"] @ raw["lin_u_w"] + raw["lin_u_b"])[None, :],
        "WcT": (A * raw["dgc_c_w"]).T,
        "lc_s": raw["lin_c_w"][F2:],
        "c_b": (raw["dgc_c_b"] @ raw["lin_c_w"] + raw["lin_c_b"])[None, :],
        "reg_w": raw["lin_reg_w"],
        "reg_b": raw["lin_reg_b"][None, :],
    }
    return jax.tree_util.tree_map(lambda a: a.astype(jnp.float32), prepped)


def ring_adjacency(N, hop):
    idx = jnp.arange(N)
    A = jnp.zeros((N, N), jnp.float32)
    A = A.at[idx, idx].set(1.0)
    A = A.at[idx, (idx + hop) % N].set(1.0)
    A = A.at[idx, (idx - hop) % N].set(1.0)
    return A


if __name__ == "__main__":
    Bsz, T, N, Fdim = 2, 4, 16, 8          # batch, steps, nodes, feature dim
    F2 = Fdim // 2

    key = jax.random.PRNGKey(0)
    k_x, k_s, k_p = jax.random.split(key, 3)

    A = ring_adjacency(N, 1)               # adjacency (with self loops)
    Badj = ring_adjacency(N, 2)

    raw = init_raw_params(k_p, N, Fdim, A, Badj)
    prepped = prepare_params(raw)

    x = jax.random.normal(k_x, (Bsz, T, N, 2), dtype=jnp.float32)
    init_state = jax.random.normal(k_s, (Bsz, N, F2), dtype=jnp.float32)

    fwd = jax.jit(decoder_vis_forward, static_argnums=(3,))
    p, M1, M2, D = fwd(prepped, x, init_state, T)
    jax.block_until_ready((p, M1, M2, D))

    assert p.shape == (Bsz, T, N, 7)        # cat(uncertainty(4), prediction(3))
    assert M1.shape == (T, Bsz, N, N)
    assert M2.shape == (T, Bsz, N, N)
    assert D.shape == (Bsz, T, N)
    assert bool(jnp.all(jnp.isfinite(p)))
    assert bool(jnp.all(jnp.isfinite(M1))) and bool(jnp.all(jnp.isfinite(M2)))
    assert bool(jnp.all(jnp.isfinite(D)))
    # softmax masks must be row-stochastic
    assert bool(jnp.allclose(jnp.sum(M1, -1), 1.0, atol=1e-4))
    assert bool(jnp.allclose(jnp.sum(M2, -1), 1.0, atol=1e-4))

    print("KERNEL_OK")
</pallas_src>

<mosaic_0001>
module attributes {stable_mosaic.version = 11 : i64} {
  func.func @_decoder_vis_kernel(%arg0: i32, %arg1: memref<1x16x3xf32, #tpu.memory_space<vmem>>, %arg2: memref<1x16x4xf32, #tpu.memory_space<vmem>>, %arg3: memref<3x12xf32, #tpu.memory_space<vmem>>, %arg4: memref<1x4xf32, #tpu.memory_space<vmem>>, %arg5: memref<4x10xf32, #tpu.memory_space<vmem>>, %arg6: memref<1x2xf32, #tpu.memory_space<vmem>>, %arg7: memref<4x6xf32, #tpu.memory_space<vmem>>, %arg8: memref<32x16xf32, #tpu.memory_space<vmem>>, %arg9: memref<8x16xf32, #tpu.memory_space<vmem>>, %arg10: memref<8x16xf32, #tpu.memory_space<vmem>>, %arg11: memref<16x16xf32, #tpu.memory_space<vmem>>, %arg12: memref<16x16xf32, #tpu.memory_space<vmem>>, %arg13: memref<16x16xf32, #tpu.memory_space<vmem>>, %arg14: memref<1x4xf32, #tpu.memory_space<vmem>>, %arg15: memref<16x16xf32, #tpu.memory_space<vmem>>, %arg16: memref<1x4xf32, #tpu.memory_space<vmem>>, %arg17: memref<16x16xf32, #tpu.memory_space<vmem>>, %arg18: memref<4x4xf32, #tpu.memory_space<vmem>>, %arg19: memref<1x4xf32, #tpu.memory_space<vmem>>, %arg20: memref<4x4xf32, #tpu.memory_space<vmem>>, %arg21: memref<1x4xf32, #tpu.memory_space<vmem>>, %arg22: memref<4x1x16x8xf32, #tpu.memory_space<vmem>>, %arg23: memref<4x1x16x16xf32, #tpu.memory_space<vmem>>, %arg24: memref<4x1x16x16xf32, #tpu.memory_space<vmem>>) attributes {dimension_semantics = [#tpu.dimension_semantics<parallel>], iteration_bounds = array<i64: 2>, scalar_prefetch = 0 : i64, scratch_operands = 0 : i64, tpu.core_type = #tpu.core_type<tc>, window_params = [{transform_indices = @transform_0, window_bounds = array<i64: 1, 16, 3>}, {transform_indices = @transform_1, window_bounds = array<i64: 1, 16, 4>}, {pipeline_mode = #tpu.pipeline_mode<synchronous>, transform_indices = @transform_2, window_bounds = array<i64: 3, 12>}, {pipeline_mode = #tpu.pipeline_mode<synchronous>, transform_indices = @transform_3, window_bounds = array<i64: 1, 4>}, {pipeline_mode = #tpu.pipeline_mode<synchronous>, transform_indices = @transform_4, window_bounds = array<i64: 4, 10>}, {pipeline_mode = #tpu.pipeline_mode<synchronous>, transform_indices = @transform_5, window_bounds = array<i64: 1, 2>}, {pipeline_mode = #tpu.pipeline_mode<synchronous>, transform_indices = @transform_6, window_bounds = array<i64: 4, 6>}, {pipeline_mode = #tpu.pipeline_mode<synchronous>, transform_indices = @transform_7, window_bounds = array<i64: 32, 16>}, {pipeline_mode = #tpu.pipeline_mode<synchronous>, transform_indices = @transform_8, window_bounds = array<i64: 8, 16>}, {pipeline_mode = #tpu.pipeline_mode<synchronous>, transform_indices = @transform_9, window_bounds = array<i64: 8, 16>}, {pipeline_mode = #tpu.pipeline_mode<synchronous>, transform_indices = @transform_10, window_bounds = array<i64: 16, 16>}, {pipeline_mode = #tpu.pipeline_mode<synchronous>, transform_indices = @transform_11, window_bounds = array<i64: 16, 16>}, {pipeline_mode = #tpu.pipeline_mode<synchronous>, transform_indices = @transform_12, window_bounds = array<i64: 16, 16>}, {pipeline_mode = #tpu.pipeline_mode<synchronous>, transform_indices = @transform_13, window_bounds = array<i64: 1, 4>}, {pipeline_mode = #tpu.pipeline_mode<synchronous>, transform_indices = @transform_14, window_bounds = array<i64: 16, 16>}, {pipeline_mode = #tpu.pipeline_mode<synchronous>, transform_indices = @transform_15, window_bounds = array<i64: 1, 4>}, {pipeline_mode = #tpu.pipeline_mode<synchronous>, transform_indices = @transform_16, window_bounds = array<i64: 16, 16>}, {pipeline_mode = #tpu.pipeline_mode<synchronous>, transform_indices = @transform_17, window_bounds = array<i64: 4, 4>}, {pipeline_mode = #tpu.pipeline_mode<synchronous>, transform_indices = @transform_18, window_bounds = array<i64: 1, 4>}, {pipeline_mode = #tpu.pipeline_mode<synchronous>, transform_indices = @transform_19, window_bounds = array<i64: 4, 4>}, {pipeline_mode = #tpu.pipeline_mode<synchronous>, transform_indices = @transform_20, window_bounds = array<i64: 1, 4>}, {transform_indices = @transform_21, window_bounds = array<i64: 4, 1, 16, 8>}, {transform_indices = @transform_22, window_bounds = array<i64: 4, 1, 16, 16>}, {transform_indices = @transform_23, window_bounds = array<i64: 4, 1, 16, 16>}]} {
    %c0 = arith.constant 0 : index
    %c0_0 = arith.constant 0 : index
    %0 = vector.load %arg3[%c0, %c0_0] : memref<3x12xf32, #tpu.memory_space<vmem>>, vector<3x12xf32>
    %c0_1 = arith.constant 0 : index
    %c0_2 = arith.constant 0 : index
    %1 = vector.load %arg5[%c0_1, %c0_2] : memref<4x10xf32, #tpu.memory_space<vmem>>, vector<4x10xf32>
    %c0_3 = arith.constant 0 : index
    %c0_4 = arith.constant 0 : index
    %2 = vector.load %arg7[%c0_3, %c0_4] : memref<4x6xf32, #tpu.memory_space<vmem>>, vector<4x6xf32>
    %c0_5 = arith.constant 0 : index
    %c0_6 = arith.constant 0 : index
    %3 = vector.load %arg8[%c0_5, %c0_6] : memref<32x16xf32, #tpu.memory_space<vmem>>, vector<32x16xf32>
    %c0_7 = arith.constant 0 : index
    %c0_8 = arith.constant 0 : index
    %4 = vector.load %arg9[%c0_7, %c0_8] : memref<8x16xf32, #tpu.memory_space<vmem>>, vector<8x16xf32>
    %c0_9 = arith.constant 0 : index
    %c0_10 = arith.constant 0 : index
    %5 = vector.load %arg10[%c0_9, %c0_10] : memref<8x16xf32, #tpu.memory_space<vmem>>, vector<8x16xf32>
    %c0_11 = arith.constant 0 : index
    %c0_12 = arith.constant 0 : index
    %6 = vector.load %arg11[%c0_11, %c0_12] : memref<16x16xf32, #tpu.memory_space<vmem>>, vector<16x16xf32>
    %c0_13 = arith.constant 0 : index
    %c0_14 = arith.constant 0 : index
    %7 = vector.load %arg12[%c0_13, %c0_14] : memref<16x16xf32, #tpu.memory_space<vmem>>, vector<16x16xf32>
    %c0_15 = arith.constant 0 : index
    %c0_16 = arith.constant 0 : index
    %8 = vector.load %arg13[%c0_15, %c0_16] : memref<16x16xf32, #tpu.memory_space<vmem>>, vector<16x16xf32>
    %c0_17 = arith.constant 0 : index
    %c0_18 = arith.constant 0 : index
    %9 = vector.load %arg15[%c0_17, %c0_18] : memref<16x16xf32, #tpu.memory_space<vmem>>, vector<16x16xf32>
    %c0_19 = arith.constant 0 : index
    %c0_20 = arith.constant 0 : index
    %10 = vector.load %arg17[%c0_19, %c0_20] : memref<16x16xf32, #tpu.memory_space<vmem>>, vector<16x16xf32>
    %c0_21 = arith.constant 0 : index
    %c0_22 = arith.constant 0 : index
    %11 = vector.load %arg18[%c0_21, %c0_22] : memref<4x4xf32, #tpu.memory_space<vmem>>, vector<4x4xf32>
    %c0_23 = arith.constant 0 : index
    %c0_24 = arith.constant 0 : index
    %12 = vector.load %arg20[%c0_23, %c0_24] : memref<4x4xf32, #tpu.memory_space<vmem>>, vector<4x4xf32>
    %c0_25 = arith.constant 0 : index
    %c0_26 = arith.constant 0 : index
    %13 = vector.load %arg4[%c0_25, %c0_26] : memref<1x4xf32, #tpu.memory_space<vmem>>, vector<1x4xf32>
    %14 = vector.shape_cast %13 : vector<1x4xf32> to vector<1x4xf32>
    %15 = vector.broadcast %14 : vector<1x4xf32> to vector<16x4xf32>
    %c0_27 = arith.constant 0 : index
    %c0_28 = arith.constant 0 : index
    %16 = vector.load %arg6[%c0_27, %c0_28] : memref<1x2xf32, #tpu.memory_space<vmem>>, vector<1x2xf32>
    %17 = vector.shape_cast %16 : vector<1x2xf32> to vector<1x2xf32>
    %18 = vector.broadcast %17 : vector<1x2xf32> to vector<16x2xf32>
    %c0_29 = arith.constant 0 : index
    %c0_30 = arith.constant 0 : index
    %19 = vector.load %arg14[%c0_29, %c0_30] : memref<1x4xf32, #tpu.memory_space<vmem>>, vector<1x4xf32>
    %20 = vector.shape_cast %19 : vector<1x4xf32> to vector<1x4xf32>
    %21 = vector.broadcast %20 : vector<1x4xf32> to vector<16x4xf32>
    %c0_31 = arith.constant 0 : index
    %c0_32 = arith.constant 0 : index
    %22 = vector.load %arg16[%c0_31, %c0_32] : memref<1x4xf32, #tpu.memory_space<vmem>>, vector<1x4xf32>
    %23 = vector.shape_cast %22 : vector<1x4xf32> to vector<1x4xf32>
    %24 = vector.broadcast %23 : vector<1x4xf32> to vector<16x4xf32>
    %c0_33 = arith.constant 0 : index
    %c0_34 = arith.constant 0 : index
    %25 = vector.load %arg19[%c0_33, %c0_34] : memref<1x4xf32, #tpu.memory_space<vmem>>, vector<1x4xf32>
    %26 = vector.shape_cast %25 : vector<1x4xf32> to vector<1x4xf32>
    %27 = vector.broadcast %26 : vector<1x4xf32> to vector<16x4xf32>
    %c0_35 = arith.constant 0 : index
    %c0_36 = arith.constant 0 : index
    %28 = vector.load %arg21[%c0_35, %c0_36] : memref<1x4xf32, #tpu.memory_space<vmem>>, vector<1x4xf32>
    %29 = vector.shape_cast %28 : vector<1x4xf32> to vector<1x4xf32>
    %30 = vector.broadcast %29 : vector<1x4xf32> to vector<16x4xf32>
    %c0_37 = arith.constant 0 : index
    %c0_38 = arith.constant 0 : index
    %c0_39 = arith.constant 0 : index
    %31 = vector.load %arg1[%c0_37, %c0_38, %c0_39] : memref<1x16x3xf32, #tpu.memory_space<vmem>>, vector<1x16x3xf32>
    %32 = vector.shape_cast %31 : vector<1x16x3xf32> to vector<16x3xf32>
    %c0_40 = arith.constant 0 : index
    %c0_41 = arith.constant 0 : index
    %c0_42 = arith.constant 0 : index
    %33 = vector.load %arg2[%c0_40, %c0_41, %c0_42] : memref<1x16x4xf32, #tpu.memory_space<vmem>>, vector<1x16x4xf32>
    %34 = vector.shape_cast %33 : vector<1x16x4xf32> to vector<16x4xf32>
    %c0_i32 = arith.constant 0 : i32
    %c4_i32 = arith.constant 4 : i32
    %35 = arith.addi %c0_i32, %c4_i32 : i32
    %c1_i32 = arith.constant 1 : i32
    %36:2 = scf.for %arg25 = %c0_i32 to %35 step %c1_i32 iter_args(%arg26 = %32, %arg27 = %34) -> (vector<16x3xf32>, vector<16x4xf32>)  : i32 {
      %cst = arith.constant dense<0.000000e+00> : vector<16x12xf32>
      %37 = tpu.matmul %arg26, %0, %cst {dimension_numbers = #tpu.dot_dimension_numbers<[1], [0], [0], [1], [0, 0, 1, 1], [], []>} : vector<16x3xf32>, vector<3x12xf32>, vector<16x12xf32> -> vector<16x12xf32>
      %38 = vector.extract_strided_slice %37 {offsets = [0, 0], sizes = [16, 4], strides = [1, 1]} : vector<16x12xf32> to vector<16x4xf32>
      %39 = arith.addf %38, %15 : vector<16x4xf32>
      %40 = vector.extract_strided_slice %37 {offsets = [0, 4], sizes = [16, 4], strides = [1, 1]} : vector<16x12xf32> to vector<16x4xf32>
      %41 = vector.extract_strided_slice %37 {offsets = [0, 8], sizes = [16, 4], strides = [1, 1]} : vector<16x12xf32> to vector<16x4xf32>
      %cst_44 = arith.constant dense<0.000000e+00> : vector<16x10xf32>
      %42 = tpu.matmul %arg27, %1, %cst_44 {dimension_numbers = #tpu.dot_dimension_numbers<[1], [0], [0], [1], [0, 0, 1, 1], [], []>} : vector<16x4xf32>, vector<4x10xf32>, vector<16x10xf32> -> vector<16x10xf32>
      %43 = vector.extract_strided_slice %42 {offsets = [0, 0], sizes = [16, 4], strides = [1, 1]} : vector<16x10xf32> to vector<16x4xf32>
      %44 = arith.addf %40, %43 : vector<16x4xf32>
      %45 = vector.extract_strided_slice %42 {offsets = [0, 4], sizes = [16, 4], strides = [1, 1]} : vector<16x10xf32> to vector<16x4xf32>
      %46 = arith.addf %41, %45 : vector<16x4xf32>
      %47 = vector.extract_strided_slice %42 {offsets = [0, 8], sizes = [16, 2], strides = [1, 1]} : vector<16x10xf32> to vector<16x2xf32>
      %cst_45 = arith.constant dense<0.000000e+00> : vector<16x6xf32>
      %48 = tpu.matmul %39, %2, %cst_45 {dimension_numbers = #tpu.dot_dimension_numbers<[1], [0], [0], [1], [0, 0, 1, 1], [], []>} : vector<16x4xf32>, vector<4x6xf32>, vector<16x6xf32> -> vector<16x6xf32>
      %49 = vector.extract_strided_slice %48 {offsets = [0, 0], sizes = [16, 2], strides = [1, 1]} : vector<16x6xf32> to vector<16x2xf32>
      %50 = vector.extract_strided_slice %48 {offsets = [0, 2], sizes = [16, 4], strides = [1, 1]} : vector<16x6xf32> to vector<16x4xf32>
      %51 = arith.addf %49, %47 : vector<16x2xf32>
      %52 = arith.addf %51, %18 : vector<16x2xf32>
      %53 = math.tanh %52 : vector<16x2xf32>
      %cst_46 = arith.constant 5.000000e-01 : f32
      %54 = vector.broadcast %cst_46 : f32 to vector<16x2xf32>
      %55 = arith.mulf %53, %54 : vector<16x2xf32>
      %56 = tpu.concatenate %39, %arg27 in 1 : vector<16x4xf32>, vector<16x4xf32> -> vector<16x8xf32>
      %cst_47 = arith.constant dense<0.000000e+00> : vector<32x8xf32>
      %57 = tpu.matmul %3, %56, %cst_47 {dimension_numbers = #tpu.dot_dimension_numbers<[1], [0], [0], [1], [0, 0, 1, 1], [], []>} : vector<32x16xf32>, vector<16x8xf32>, vector<32x8xf32> -> vector<32x8xf32>
      %58 = vector.extract_strided_slice %57 {offsets = [0, 0], sizes = [16, 8], strides = [1, 1]} : vector<32x8xf32> to vector<16x8xf32>
      %cst_48 = arith.constant dense<0.000000e+00> : vector<16x16xf32>
      %59 = tpu.matmul %58, %4, %cst_48 {dimension_numbers = #tpu.dot_dimension_numbers<[1], [0], [0], [1], [0, 0, 1, 1], [], []>} : vector<16x8xf32>, vector<8x16xf32>, vector<16x16xf32> -> vector<16x16xf32>
      %60 = arith.addf %59, %6 : vector<16x16xf32>
      %61 = vector.extract_strided_slice %57 {offsets = [16, 0], sizes = [16, 8], strides = [1, 1]} : vector<32x8xf32> to vector<16x8xf32>
      %cst_49 = arith.constant dense<0.000000e+00> : vector<16x16xf32>
      %62 = tpu.matmul %61, %5, %cst_49 {dimension_numbers = #tpu.dot_dimension_numbers<[1], [0], [0], [1], [0, 0, 1, 1], [], []>} : vector<16x8xf32>, vector<8x16xf32>, vector<16x16xf32> -> vector<16x16xf32>
      %63 = arith.addf %62, %7 : vector<16x16xf32>
      %cst_50 = arith.constant dense<0xFF800000> : vector<16xf32>
      %64 = vector.multi_reduction <maximumf>, %60, %cst_50 [1] : vector<16x16xf32> to vector<16xf32>
      %65 = vector.shape_cast %64 : vector<16xf32> to vector<16x1xf32>
      %66 = vector.broadcast %65 : vector<16x1xf32> to vector<16x16xf32>
      %67 = arith.subf %60, %66 : vector<16x16xf32>
      %68 = math.exp %67 : vector<16x16xf32>
      %cst_51 = arith.constant dense<0.000000e+00> : vector<16xf32>
      %69 = vector.multi_reduction <add>, %68, %cst_51 [1] : vector<16x16xf32> to vector<16xf32>
      %70 = vector.shape_cast %69 : vector<16xf32> to vector<16x1xf32>
      %71 = vector.broadcast %70 : vector<16x1xf32> to vector<16x16xf32>
      %72 = arith.divf %68, %71 : vector<16x16xf32>
      %cst_52 = arith.constant dense<0xFF800000> : vector<16xf32>
      %73 = vector.multi_reduction <maximumf>, %63, %cst_52 [1] : vector<16x16xf32> to vector<16xf32>
      %74 = vector.shape_cast %73 : vector<16xf32> to vector<16x1xf32>
      %75 = vector.broadcast %74 : vector<16x1xf32> to vector<16x16xf32>
      %76 = arith.subf %63, %75 : vector<16x16xf32>
      %77 = math.exp %76 : vector<16x16xf32>
      %cst_53 = arith.constant dense<0.000000e+00> : vector<16xf32>
      %78 = vector.multi_reduction <add>, %77, %cst_53 [1] : vector<16x16xf32> to vector<16xf32>
      %79 = vector.shape_cast %78 : vector<16xf32> to vector<16x1xf32>
      %80 = vector.broadcast %79 : vector<16x1xf32> to vector<16x16xf32>
      %81 = arith.divf %77, %80 : vector<16x16xf32>
      %82 = vector.extract_strided_slice %arg26 {offsets = [0, 0], sizes = [16, 2], strides = [1, 1]} : vector<16x3xf32> to vector<16x2xf32>
      %cst_54 = arith.constant dense<0.000000e+00> : vector<16x2xf32>
      %83 = tpu.matmul %72, %82, %cst_54 {dimension_numbers = #tpu.dot_dimension_numbers<[1], [0], [0], [1], [0, 0, 1, 1], [], []>} : vector<16x16xf32>, vector<16x2xf32>, vector<16x2xf32> -> vector<16x2xf32>
      %cst_55 = arith.constant dense<0.000000e+00> : vector<16x2xf32>
      %84 = tpu.matmul %81, %82, %cst_55 {dimension_numbers = #tpu.dot_dimension_numbers<[1], [0], [0], [1], [0, 0, 1, 1], [], []>} : vector<16x16xf32>, vector<16x2xf32>, vector<16x2xf32> -> vector<16x2xf32>
      %85 = tpu.iota {dimensions = array<i32: 1>} : vector<16x2xi32>
      %c0_i32_56 = arith.constant 0 : i32
      %86 = vector.broadcast %c0_i32_56 : i32 to vector<16x2xi32>
      %87 = arith.cmpi eq, %85, %86 : vector<16x2xi32>
      %88 = arith.select %87, %83, %84 : vector<16x2xi1>, vector<16x2xf32>
      %89 = arith.addf %88, %55 : vector<16x2xf32>
      %cst_57 = arith.constant dense<0.000000e+00> : vector<16x4xf32>
      %90 = tpu.matmul %8, %44, %cst_57 {dimension_numbers = #tpu.dot_dimension_numbers<[1], [0], [0], [1], [0, 0, 1, 1], [], []>} : vector<16x16xf32>, vector<16x4xf32>, vector<16x4xf32> -> vector<16x4xf32>
      %91 = arith.addf %90, %21 : vector<16x4xf32>
      %92 = arith.negf %91 : vector<16x4xf32>
      %93 = math.exp %92 : vector<16x4xf32>
      %cst_58 = arith.constant 1.000000e+00 : f32
      %94 = vector.broadcast %cst_58 : f32 to vector<16x4xf32>
      %95 = arith.addf %94, %93 : vector<16x4xf32>
      %96 = arith.divf %94, %95 : vector<16x4xf32>
      %cst_59 = arith.constant dense<0.000000e+00> : vector<16x4xf32>
      %97 = tpu.matmul %9, %46, %cst_59 {dimension_numbers = #tpu.dot_dimension_numbers<[1], [0], [0], [1], [0, 0, 1, 1], [], []>} : vector<16x16xf32>, vector<16x4xf32>, vector<16x4xf32> -> vector<16x4xf32>
      %98 = arith.addf %97, %24 : vector<16x4xf32>
      %99 = arith.negf %98 : vector<16x4xf32>
      %100 = math.exp %99 : vector<16x4xf32>
      %cst_60 = arith.constant 1.000000e+00 : f32
      %101 = vector.broadcast %cst_60 : f32 to vector<16x4xf32>
      %102 = arith.addf %101, %100 : vector<16x4xf32>
      %103 = arith.divf %101, %102 : vector<16x4xf32>
      %104 = arith.mulf %96, %arg27 : vector<16x4xf32>
      %cst_61 = arith.constant dense<0.000000e+00> : vector<16x4xf32>
      %105 = tpu.matmul %104, %11, %cst_61 {dimension_numbers = #tpu.dot_dimension_numbers<[1], [0], [0], [1], [0, 0, 1, 1], [], []>} : vector<16x4xf32>, vector<4x4xf32>, vector<16x4xf32> -> vector<16x4xf32>
      %106 = arith.addf %50, %105 : vector<16x4xf32>
      %cst_62 = arith.constant dense<0.000000e+00> : vector<16x4xf32>
      %107 = tpu.matmul %10, %106, %cst_62 {dimension_numbers = #tpu.dot_dimension_numbers<[1], [0], [0], [1], [0, 0, 1, 1], [], []>} : vector<16x16xf32>, vector<16x4xf32>, vector<16x4xf32> -> vector<16x4xf32>
      %108 = arith.addf %107, %27 : vector<16x4xf32>
      %109 = math.tanh %108 : vector<16x4xf32>
      %110 = arith.mulf %103, %arg27 : vector<16x4xf32>
      %cst_63 = arith.constant 1.000000e+00 : f32
      %111 = vector.broadcast %cst_63 : f32 to vector<16x4xf32>
      %112 = arith.subf %111, %103 : vector<16x4xf32>
      %113 = arith.mulf %112, %109 : vector<16x4xf32>
      %114 = arith.addf %110, %113 : vector<16x4xf32>
      %cst_64 = arith.constant dense<0.000000e+00> : vector<16x4xf32>
      %115 = tpu.matmul %114, %12, %cst_64 {dimension_numbers = #tpu.dot_dimension_numbers<[1], [0], [0], [1], [0, 0, 1, 1], [], []>} : vector<16x4xf32>, vector<4x4xf32>, vector<16x4xf32> -> vector<16x4xf32>
      %116 = arith.addf %115, %30 : vector<16x4xf32>
      %117 = vector.extract_strided_slice %116 {offsets = [0, 3], sizes = [16, 1], strides = [1, 1]} : vector<16x4xf32> to vector<16x1xf32>
      %118 = arith.negf %117 : vector<16x1xf32>
      %119 = math.exp %118 : vector<16x1xf32>
      %cst_65 = arith.constant 1.000000e+00 : f32
      %120 = vector.broadcast %cst_65 : f32 to vector<16x1xf32>
      %121 = arith.addf %120, %119 : vector<16x1xf32>
      %122 = arith.divf %120, %121 : vector<16x1xf32>
      %123 = vector.extract_strided_slice %116 {offsets = [0, 0], sizes = [16, 1], strides = [1, 1]} : vector<16x4xf32> to vector<16x1xf32>
      %cst_66 = arith.constant 0.000000e+00 : f32
      %124 = vector.broadcast %cst_66 : f32 to vector<16x1xf32>
      %125 = arith.maximumf %123, %124 : vector<16x1xf32>
      %126 = math.absf %123 : vector<16x1xf32>
      %cst_67 = arith.constant 0.000000e+00 : f32
      %127 = vector.broadcast %cst_67 : f32 to vector<16x1xf32>
      %128 = arith.subf %127, %126 : vector<16x1xf32>
      %129 = math.exp %128 : vector<16x1xf32>
      %cst_68 = arith.constant 1.000000e+00 : f32
      %130 = vector.broadcast %cst_68 : f32 to vector<16x1xf32>
      %131 = arith.addf %130, %129 : vector<16x1xf32>
      %132 = math.log %131 : vector<16x1xf32>
      %133 = arith.addf %125, %132 : vector<16x1xf32>
      %cst_69 = arith.constant 2.000000e+00 : f32
      %134 = vector.broadcast %cst_69 : f32 to vector<16x1xf32>
      %135 = arith.addf %133, %134 : vector<16x1xf32>
      %136 = vector.extract_strided_slice %116 {offsets = [0, 1], sizes = [16, 1], strides = [1, 1]} : vector<16x4xf32> to vector<16x1xf32>
      %cst_70 = arith.constant 0.000000e+00 : f32
      %137 = vector.broadcast %cst_70 : f32 to vector<16x1xf32>
      %138 = arith.maximumf %136, %137 : vector<16x1xf32>
      %139 = math.absf %136 : vector<16x1xf32>
      %cst_71 = arith.constant 0.000000e+00 : f32
      %140 = vector.broadcast %cst_71 : f32 to vector<16x1xf32>
      %141 = arith.subf %140, %139 : vector<16x1xf32>
      %142 = math.exp %141 : vector<16x1xf32>
      %cst_72 = arith.constant 1.000000e+00 : f32
      %143 = vector.broadcast %cst_72 : f32 to vector<16x1xf32>
      %144 = arith.addf %143, %142 : vector<16x1xf32>
      %145 = math.log %144 : vector<16x1xf32>
      %146 = arith.addf %138, %145 : vector<16x1xf32>
      %147 = vector.extract_strided_slice %116 {offsets = [0, 2], sizes = [16, 1], strides = [1, 1]} : vector<16x4xf32> to vector<16x1xf32>
      %cst_73 = arith.constant 2.000000e+00 : f32
      %148 = vector.broadcast %cst_73 : f32 to vector<16x1xf32>
      %149 = arith.addf %147, %148 : vector<16x1xf32>
      %cst_74 = arith.constant 0.000000e+00 : f32
      %150 = vector.broadcast %cst_74 : f32 to vector<16x1xf32>
      %151 = arith.maximumf %149, %150 : vector<16x1xf32>
      %152 = math.absf %149 : vector<16x1xf32>
      %cst_75 = arith.constant 0.000000e+00 : f32
      %153 = vector.broadcast %cst_75 : f32 to vector<16x1xf32>
      %154 = arith.subf %153, %152 : vector<16x1xf32>
      %155 = math.exp %154 : vector<16x1xf32>
      %cst_76 = arith.constant 1.000000e+00 : f32
      %156 = vector.broadcast %cst_76 : f32 to vector<16x1xf32>
      %157 = arith.addf %156, %155 : vector<16x1xf32>
      %158 = math.log %157 : vector<16x1xf32>
      %159 = arith.addf %151, %158 : vector<16x1xf32>
      %cst_77 = arith.constant 1.000000e+00 : f32
      %160 = vector.broadcast %cst_77 : f32 to vector<16x1xf32>
      %161 = arith.addf %159, %160 : vector<16x1xf32>
      %162 = arith.mulf %146, %161 : vector<16x1xf32>
      %cst_78 = arith.constant 1.000000e+00 : f32
      %163 = vector.broadcast %cst_78 : f32 to vector<16x1xf32>
      %164 = arith.subf %135, %163 : vector<16x1xf32>
      %165 = arith.mulf %159, %164 : vector<16x1xf32>
      %166 = arith.divf %162, %165 : vector<16x1xf32>
      %167 = math.sqrt %166 : vector<16x1xf32>
      %168 = tpu.concatenate %89, %167 in 1 : vector<16x2xf32>, vector<16x1xf32> -> vector<16x3xf32>
      %169 = vector.extract_strided_slice %55 {offsets = [0, 1], sizes = [16, 1], strides = [1, 1]} : vector<16x2xf32> to vector<16x1xf32>
      %170 = tpu.concatenate %122, %159, %135, %146, %89, %167, %169 in 1 : vector<16x1xf32>, vector<16x1xf32>, vector<16x1xf32>, vector<16x1xf32>, vector<16x2xf32>, vector<16x1xf32>, vector<16x1xf32> -> vector<16x8xf32>
      %171 = arith.index_cast %arg25 : i32 to index
      %c0_79 = arith.constant 0 : index
      %c0_80 = arith.constant 0 : index
      %c0_81 = arith.constant 0 : index
      %172 = vector.load %arg22[%171, %c0_79, %c0_80, %c0_81] : memref<4x1x16x8xf32, #tpu.memory_space<vmem>>, vector<1x1x16x8xf32>
      %173 = vector.shape_cast %172 : vector<1x1x16x8xf32> to vector<16x8xf32>
      %174 = vector.shape_cast %170 : vector<16x8xf32> to vector<1x1x16x8xf32>
      tpu.vector_store %arg22[%171, %c0_79, %c0_80, %c0_81], %174 {strides = array<i32>} : memref<4x1x16x8xf32, #tpu.memory_space<vmem>>, vector<1x1x16x8xf32>,
      %175 = arith.index_cast %arg25 : i32 to index
      %c0_82 = arith.constant 0 : index
      %c0_83 = arith.constant 0 : index
      %c0_84 = arith.constant 0 : index
      %176 = vector.load %arg23[%175, %c0_82, %c0_83, %c0_84] : memref<4x1x16x16xf32, #tpu.memory_space<vmem>>, vector<1x1x16x16xf32>
      %177 = vector.shape_cast %176 : vector<1x1x16x16xf32> to vector<16x16xf32>
      %178 = vector.shape_cast %72 : vector<16x16xf32> to vector<1x1x16x16xf32>
      tpu.vector_store %arg23[%175, %c0_82, %c0_83, %c0_84], %178 {strides = array<i32>} : memref<4x1x16x16xf32, #tpu.memory_space<vmem>>, vector<1x1x16x16xf32>,
      %179 = arith.index_cast %arg25 : i32 to index
      %c0_85 = arith.constant 0 : index
      %c0_86 = arith.constant 0 : index
      %c0_87 = arith.constant 0 : index
      %180 = vector.load %arg24[%179, %c0_85, %c0_86, %c0_87] : memref<4x1x16x16xf32, #tpu.memory_space<vmem>>, vector<1x1x16x16xf32>
      %181 = vector.shape_cast %180 : vector<1x1x16x16xf32> to vector<16x16xf32>
      %182 = vector.shape_cast %81 : vector<16x16xf32> to vector<1x1x16x16xf32>
      tpu.vector_store %arg24[%179, %c0_85, %c0_86, %c0_87], %182 {strides = array<i32>} : memref<4x1x16x16xf32, #tpu.memory_space<vmem>>, vector<1x1x16x16xf32>,
      scf.yield %168, %114 : vector<16x3xf32>, vector<16x4xf32>
    }
    %c4_i32_43 = arith.constant 4 : i32
    return
  }
  func.func @transform_0(%arg0: i32) -> (i32, i32, i32) {
    %c0_i32 = arith.constant 0 : i32
    %c0_i32_0 = arith.constant 0 : i32
    %c0_i32_1 = arith.constant 0 : i32
    return %arg0, %c0_i32, %c0_i32_0 : i32, i32, i32
  }
  func.func @transform_1(%arg0: i32) -> (i32, i32, i32) {
    %c0_i32 = arith.constant 0 : i32
    %c0_i32_0 = arith.constant 0 : i32
    %c0_i32_1 = arith.constant 0 : i32
    return %arg0, %c0_i32, %c0_i32_0 : i32, i32, i32
  }
  func.func @transform_2(%arg0: i32) -> (i32, i32) {
    %c0_i32 = arith.constant 0 : i32
    %c0_i32_0 = arith.constant 0 : i32
    %c0_i32_1 = arith.constant 0 : i32
    return %c0_i32, %c0_i32_0 : i32, i32
  }
  func.func @transform_3(%arg0: i32) -> (i32, i32) {
    %c0_i32 = arith.constant 0 : i32
    %c0_i32_0 = arith.constant 0 : i32
    %c0_i32_1 = arith.constant 0 : i32
    return %c0_i32, %c0_i32_0 : i32, i32
  }
  func.func @transform_4(%arg0: i32) -> (i32, i32) {
    %c0_i32 = arith.constant 0 : i32
    %c0_i32_0 = arith.constant 0 : i32
    %c0_i32_1 = arith.constant 0 : i32
    return %c0_i32, %c0_i32_0 : i32, i32
  }
  func.func @transform_5(%arg0: i32) -> (i32, i32) {
    %c0_i32 = arith.constant 0 : i32
    %c0_i32_0 = arith.constant 0 : i32
    %c0_i32_1 = arith.constant 0 : i32
    return %c0_i32, %c0_i32_0 : i32, i32
  }
  func.func @transform_6(%arg0: i32) -> (i32, i32) {
    %c0_i32 = arith.constant 0 : i32
    %c0_i32_0 = arith.constant 0 : i32
    %c0_i32_1 = arith.constant 0 : i32
    return %c0_i32, %c0_i32_0 : i32, i32
  }
  func.func @transform_7(%arg0: i32) -> (i32, i32) {
    %c0_i32 = arith.constant 0 : i32
    %c0_i32_0 = arith.constant 0 : i32
    %c0_i32_1 = arith.constant 0 : i32
    return %c0_i32, %c0_i32_0 : i32, i32
  }
  func.func @transform_8(%arg0: i32) -> (i32, i32) {
    %c0_i32 = arith.constant 0 : i32
    %c0_i32_0 = arith.constant 0 : i32
    %c0_i32_1 = arith.constant 0 : i32
    return %c0_i32, %c0_i32_0 : i32, i32
  }
  func.func @transform_9(%arg0: i32) -> (i32, i32) {
    %c0_i32 = arith.constant 0 : i32
    %c0_i32_0 = arith.constant 0 : i32
    %c0_i32_1 = arith.constant 0 : i32
    return %c0_i32, %c0_i32_0 : i32, i32
  }
  func.func @transform_10(%arg0: i32) -> (i32, i32) {
    %c0_i32 = arith.constant 0 : i32
    %c0_i32_0 = arith.constant 0 : i32
    %c0_i32_1 = arith.constant 0 : i32
    return %c0_i32, %c0_i32_0 : i32, i32
  }
  func.func @transform_11(%arg0: i32) -> (i32, i32) {
    %c0_i32 = arith.constant 0 : i32
    %c0_i32_0 = arith.constant 0 : i32
    %c0_i32_1 = arith.constant 0 : i32
    return %c0_i32, %c0_i32_0 : i32, i32
  }
  func.func @transform_12(%arg0: i32) -> (i32, i32) {
    %c0_i32 = arith.constant 0 : i32
    %c0_i32_0 = arith.constant 0 : i32
    %c0_i32_1 = arith.constant 0 : i32
    return %c0_i32, %c0_i32_0 : i32, i32
  }
  func.func @transform_13(%arg0: i32) -> (i32, i32) {
    %c0_i32 = arith.constant 0 : i32
    %c0_i32_0 = arith.constant 0 : i32
    %c0_i32_1 = arith.constant 0 : i32
    return %c0_i32, %c0_i32_0 : i32, i32
  }
  func.func @transform_14(%arg0: i32) -> (i32, i32) {
    %c0_i32 = arith.constant 0 : i32
    %c0_i32_0 = arith.constant 0 : i32
    %c0_i32_1 = arith.constant 0 : i32
    return %c0_i32, %c0_i32_0 : i32, i32
  }
  func.func @transform_15(%arg0: i32) -> (i32, i32) {
    %c0_i32 = arith.constant 0 : i32
    %c0_i32_0 = arith.constant 0 : i32
    %c0_i32_1 = arith.constant 0 : i32
    return %c0_i32, %c0_i32_0 : i32, i32
  }
  func.func @transform_16(%arg0: i32) -> (i32, i32) {
    %c0_i32 = arith.constant 0 : i32
    %c0_i32_0 = arith.constant 0 : i32
    %c0_i32_1 = arith.constant 0 : i32
    return %c0_i32, %c0_i32_0 : i32, i32
  }
  func.func @transform_17(%arg0: i32) -> (i32, i32) {
    %c0_i32 = arith.constant 0 : i32
    %c0_i32_0 = arith.constant 0 : i32
    %c0_i32_1 = arith.constant 0 : i32
    return %c0_i32, %c0_i32_0 : i32, i32
  }
  func.func @transform_18(%arg0: i32) -> (i32, i32) {
    %c0_i32 = arith.constant 0 : i32
    %c0_i32_0 = arith.constant 0 : i32
    %c0_i32_1 = arith.constant 0 : i32
    return %c0_i32, %c0_i32_0 : i32, i32
  }
  func.func @transform_19(%arg0: i32) -> (i32, i32) {
    %c0_i32 = arith.constant 0 : i32
    %c0_i32_0 = arith.constant 0 : i32
    %c0_i32_1 = arith.constant 0 : i32
    return %c0_i32, %c0_i32_0 : i32, i32
  }
  func.func @transform_20(%arg0: i32) -> (i32, i32) {
    %c0_i32 = arith.constant 0 : i32
    %c0_i32_0 = arith.constant 0 : i32
    %c0_i32_1 = arith.constant 0 : i32
    return %c0_i32, %c0_i32_0 : i32, i32
  }
  func.func @transform_21(%arg0: i32) -> (i32, i32, i32, i32) {
    %c0_i32 = arith.constant 0 : i32
    %c0_i32_0 = arith.constant 0 : i32
    %c0_i32_1 = arith.constant 0 : i32
    %c0_i32_2 = arith.constant 0 : i32
    return %c0_i32, %arg0, %c0_i32_0, %c0_i32_1 : i32, i32, i32, i32
  }
  func.func @transform_22(%arg0: i32) -> (i32, i32, i32, i32) {
    %c0_i32 = arith.constant 0 : i32
    %c0_i32_0 = arith.constant 0 : i32
    %c0_i32_1 = arith.constant 0 : i32
    %c0_i32_2 = arith.constant 0 : i32
    return %c0_i32, %arg0, %c0_i32_0, %c0_i32_1 : i32, i32, i32, i32
  }
  func.func @transform_23(%arg0: i32) -> (i32, i32, i32, i32) {
    %c0_i32 = arith.constant 0 : i32
    %c0_i32_0 = arith.constant 0 : i32
    %c0_i32_1 = arith.constant 0 : i32
    %c0_i32_2 = arith.constant 0 : i32
    return %c0_i32, %arg0, %c0_i32_0, %c0_i32_1 : i32, i32, i32, i32
  }
}

</mosaic_0001>

<llo_original>
// kernel: decoder_vis_forward.1
$region0: #{decoder_vis_forward.1}
  #allocation0 [shape = 'u32[]', space=smem, size = 0x4, offset = 0x4, fixed_abs, tag = 'smem constant byte address 0x4 - core index']
  #allocation1 [shape = 'u32[144,128]{1,0:T(1,128)}', space=vmem, size = 0x12000, scoped, tag = 'internal scratch']
  #allocation7 [shape = 's32[]', space=sflag, size = 0x4, offset = 0, fixed_abs, tag = 'sflag constant byte address 0x0 - dummy sync flag']
  #allocation9 [shape = 's32[]', space=sflag, size = 0x4, offset = 0, fixed_abs, tag = 'sflag constant byte address 0x0 - dummy sync flag']
  %s0 = inlined_call_operand.vmem [shape: f32[2,16,3], index: 0, kind: input, shape index: {}]
  %s1 = inlined_call_operand.vmem [shape: f32[2,16,4], index: 1, kind: input, shape index: {}]
  %s2 = inlined_call_operand.vmem [shape: f32[3,12], index: 2, kind: input, shape index: {}]
  %s3 = inlined_call_operand.vmem [shape: f32[1,4], index: 3, kind: input, shape index: {}]
  %s4 = inlined_call_operand.vmem [shape: f32[4,10], index: 4, kind: input, shape index: {}]
  %s5 = inlined_call_operand.vmem [shape: f32[1,2], index: 5, kind: input, shape index: {}]
  %s6 = inlined_call_operand.vmem [shape: f32[4,6], index: 6, kind: input, shape index: {}]
  %s7 = inlined_call_operand.vmem [shape: f32[32,16], index: 7, kind: input, shape index: {}]
  %s8 = inlined_call_operand.vmem [shape: f32[8,16], index: 8, kind: input, shape index: {}]
  %s9 = inlined_call_operand.vmem [shape: f32[8,16], index: 9, kind: input, shape index: {}]
  %s10 = inlined_call_operand.vmem [shape: f32[16,16], index: 10, kind: input, shape index: {}]
  %s11 = inlined_call_operand.vmem [shape: f32[16,16], index: 11, kind: input, shape index: {}]
  %s12 = inlined_call_operand.vmem [shape: f32[16,16], index: 12, kind: input, shape index: {}]
  %s13 = inlined_call_operand.vmem [shape: f32[1,4], index: 13, kind: input, shape index: {}]
  %s14 = inlined_call_operand.vmem [shape: f32[16,16], index: 14, kind: input, shape index: {}]
  %s15 = inlined_call_operand.vmem [shape: f32[1,4], index: 15, kind: input, shape index: {}]
  %s16 = inlined_call_operand.vmem [shape: f32[16,16], index: 16, kind: input, shape index: {}]
  %s17 = inlined_call_operand.vmem [shape: f32[4,4], index: 17, kind: input, shape index: {}]
  %s18 = inlined_call_operand.vmem [shape: f32[1,4], index: 18, kind: input, shape index: {}]
  %s19 = inlined_call_operand.vmem [shape: f32[4,4], index: 19, kind: input, shape index: {}]
  %s20 = inlined_call_operand.vmem [shape: f32[1,4], index: 20, kind: input, shape index: {}]
  %s21 = inlined_call_operand.vmem [shape: f32[4,2,16,8], index: 21, kind: output, shape index: {0}]
  %s22 = inlined_call_operand.hbm [shape: f32[4,2,16,16], index: 22, kind: output, shape index: {1}]
  %s23 = inlined_call_operand.hbm [shape: f32[4,2,16,16], index: 23, kind: output, shape index: {2}]
  %24 = xla_tuple %s21, %s22, %s23
  %s25 = sld [smem:[#allocation0]]
  $region174: #{decoder_vis_forward.1} parent=0
    _
  %s27 = ssub.s32 1, %s25
  %s28 = scalar_select 0, %s27, %s25
  $region1: #{decoder_vis_forward.1} parent=0
    #allocation2 [shape = 'u8[65536]{0}', space=vmem, size = 0x10000, scoped, tag = 'output window, operand 0']
    #allocation3 [shape = 'u8[65536]{0}', space=vmem, size = 0x10000, scoped, tag = 'output window, operand 1']
    #allocation4 [shape = 's32[2]{0}', space=sflag, size = 0x8, scoped, tag = 'scoped memory for decoder_vis_forward.1']
    #allocation5 [shape = 'u8[65536]{0}', space=vmem, size = 0x10000, scoped, tag = 'output window, operand 2']
    #allocation6 [shape = 's32[2]{0}', space=sflag, size = 0x8, scoped, tag = 'scoped memory for decoder_vis_forward.1']
    %29 = vsyncpa [#allocation4], 0
    %s30 = scalar_lea.sflag [#allocation4], 1
    %31 = vsyncpa %s30, 0
    %32 = vsyncpa [#allocation6], 0
    %s33 = scalar_lea.sflag [#allocation6], 1
    %34 = vsyncpa %s33, 0
    loop: start=0, step=1, limit=4
    $region2: #{decoder_vis_forward.1} parent=1 // loop_pre_header
      _
    $region3: #{decoder_vis_forward.1} parent=1 // loop_header
      %s36 = sphi 0, %s40
      %p37 = scmp.ge.s32.totalorder %s36, 4
      %s46 = sphi 0, %s48
      %s49 = sphi 0, %s46
      %s50 = sphi 0, %s49
      %s66 = sphi 0, %s50
      %s72 = sphi 0, %s74
      %s75 = sphi 0, %s72
      %s76 = sphi 0, %s75
      %s92 = sphi 0, %s76
      %s96 = sphi 0, %s96
      %s98 = sphi 0, %s96
      %s99 = sphi 0, %s98
      %s113 = sphi 0, %s99
      %s117 = sphi 0, %s117
      %s119 = sphi 0, %s117
      %s120 = sphi 0, %s119
      %s134 = sphi 0, %s120
      %s138 = sphi 0, %s138
      %s140 = sphi 0, %s138
      %s141 = sphi 0, %s140
      %s155 = sphi 0, %s141
      %s159 = sphi 0, %s159
      %s161 = sphi 0, %s159
      %s162 = sphi 0, %s161
      %s176 = sphi 0, %s162
      %s180 = sphi 0, %s180
      %s182 = sphi 0, %s180
      %s183 = sphi 0, %s182
      %s197 = sphi 0, %s183
      %s201 = sphi 0, %s201
      %s203 = sphi 0, %s201
      %s204 = sphi 0, %s203
      %s218 = sphi 0, %s204
      %s222 = sphi 0, %s222
      %s224 = sphi 0, %s222
      %s225 = sphi 0, %s224
      %s239 = sphi 0, %s225
      %s243 = sphi 0, %s243
      %s245 = sphi 0, %s243
      %s246 = sphi 0, %s245
      %s260 = sphi 0, %s246
      %s264 = sphi 0, %s264
      %s266 = sphi 0, %s264
      %s267 = sphi 0, %s266
      %s281 = sphi 0, %s267
      %s285 = sphi 0, %s285
      %s287 = sphi 0, %s285
      %s288 = sphi 0, %s287
      %s302 = sphi 0, %s288
      %s306 = sphi 0, %s306
      %s308 = sphi 0, %s306
      %s309 = sphi 0, %s308
      %s323 = sphi 0, %s309
      %s327 = sphi 0, %s327
      %s329 = sphi 0, %s327
      %s330 = sphi 0, %s329
      %s344 = sphi 0, %s330
      %s348 = sphi 0, %s348
      %s350 = sphi 0, %s348
      %s351 = sphi 0, %s350
      %s365 = sphi 0, %s351
      %s369 = sphi 0, %s369
      %s371 = sphi 0, %s369
      %s372 = sphi 0, %s371
      %s386 = sphi 0, %s372
      %s390 = sphi 0, %s390
      %s392 = sphi 0, %s390
      %s393 = sphi 0, %s392
      %s407 = sphi 0, %s393
      %s411 = sphi 0, %s411
      %s413 = sphi 0, %s411
      %s414 = sphi 0, %s413
      %s428 = sphi 0, %s414
      %s432 = sphi 0, %s432
      %s434 = sphi 0, %s432
      %s435 = sphi 0, %s434
      %s449 = sphi 0, %s435
      %s453 = sphi 0, %s453
      %s455 = sphi 0, %s453
      %s456 = sphi 0, %s455
      %s470 = sphi 0, %s456
      %s474 = sphi 0, %s474
      %s476 = sphi 0, %s474
      %s477 = sphi 0, %s476
      %s491 = sphi 0, %s477
      %s497 = sphi 0, %s499
      %s500 = sphi 0, %s497
      %s501 = sphi 0, %s500
      %s517 = sphi 0, %s501
      %s523 = sphi 0, %s525
      %s526 = sphi 0, %s523
      %s527 = sphi 0, %s526
      %s543 = sphi 0, %s527
      %s549 = sphi 0, %s551
      %s552 = sphi 0, %s549
      %s553 = sphi 0, %s552
      %s569 = sphi 0, %s553
    $region4: #{decoder_vis_forward.1} parent=1 // loop_header_branch
      %39 = sbr.rel (%p37) target = $region8
    $region5: #{decoder_vis_forward.1} parent=1 // loop_body
      %s41 = ssub.s32 %s36, 1
      %s42 = ssub.s32 %s36, 2
      %s43 = sadd.s32 %s36, 1
      %s44 = ssub.s32 %s36, %s43
      %p45 = scmp.eq.s32.totalorder %s44, 0
      %s47 = sadd.s32 %s46, 1
      %s48 = scalar_select %p45, %s46, %s47
      %p51 = pneg %p45
      %p52 = scmp.eq.s32.totalorder %s36, 1
      %p53 = por %p51, %p52
      %p54 = scmp.ne.s32.totalorder %s46, %s49
      %p55 = scmp.eq.s32.totalorder %s36, 0
      %p56 = por %p54, %p55
      %p57 = scmp.ne.s32.totalorder %s46, %s49
      %p58 = scmp.eq.s32.totalorder %s41, 1
      %p59 = por %p57, %p58
      %p60 = scmp.ne.s32.totalorder %s49, %s50
      %p61 = scmp.eq.s32.totalorder %s41, 0
      %p62 = por %p60, %p61
      %p63 = scmp.ne.s32.totalorder %s49, %s50
      %p64 = scmp.eq.s32.totalorder %s42, 1
      %p65 = por %p63, %p64
      %p67 = scmp.ne.s32.totalorder %s50, %s66
      %p68 = scmp.eq.s32.totalorder %s42, 0
      %p69 = por %p67, %p68
      %s70 = ssub.s32 %s36, %s43
      %p71 = scmp.eq.s32.totalorder %s70, 0
      %s73 = sadd.s32 %s72, 1
      %s74 = scalar_select %p71, %s72, %s73
      %p77 = pneg %p71
      %p78 = scmp.eq.s32.totalorder %s36, 1
      %p79 = por %p77, %p78
      %p80 = scmp.ne.s32.totalorder %s72, %s75
      %p81 = scmp.eq.s32.totalorder %s36, 0
      %p82 = por %p80, %p81
      %p83 = scmp.ne.s32.totalorder %s72, %s75
      %p84 = scmp.eq.s32.totalorder %s41, 1
      %p85 = por %p83, %p84
      %p86 = scmp.ne.s32.totalorder %s75, %s76
      %p87 = scmp.eq.s32.totalorder %s41, 0
      %p88 = por %p86, %p87
      %p89 = scmp.ne.s32.totalorder %s75, %s76
      %p90 = scmp.eq.s32.totalorder %s42, 1
      %p91 = por %p89, %p90
      %p93 = scmp.ne.s32.totalorder %s76, %s92
      %p94 = scmp.eq.s32.totalorder %s42, 0
      %p95 = por %p93, %p94
      %s97 = sadd.s32 %s96, 1
      %p100 = scmp.eq.s32.totalorder %s36, 1
      %p101 = scmp.ne.s32.totalorder %s96, %s98
      %p102 = scmp.eq.s32.totalorder %s36, 0
      %p103 = por %p101, %p102
      %p104 = scmp.ne.s32.totalorder %s96, %s98
      %p105 = scmp.eq.s32.totalorder %s41, 1
      %p106 = por %p104, %p105
      %p107 = scmp.ne.s32.totalorder %s98, %s99
      %p108 = scmp.eq.s32.totalorder %s41, 0
      %p109 = por %p107, %p108
      %p110 = scmp.ne.s32.totalorder %s98, %s99
      %p111 = scmp.eq.s32.totalorder %s42, 1
      %p112 = por %p110, %p111
      %p114 = scmp.ne.s32.totalorder %s99, %s113
      %p115 = scmp.eq.s32.totalorder %s42, 0
      %p116 = por %p114, %p115
      %s118 = sadd.s32 %s117, 1
      %p121 = scmp.eq.s32.totalorder %s36, 1
      %p122 = scmp.ne.s32.totalorder %s117, %s119
      %p123 = scmp.eq.s32.totalorder %s36, 0
      %p124 = por %p122, %p123
      %p125 = scmp.ne.s32.totalorder %s117, %s119
      %p126 = scmp.eq.s32.totalorder %s41, 1
      %p127 = por %p125, %p126
      %p128 = scmp.ne.s32.totalorder %s119, %s120
      %p129 = scmp.eq.s32.totalorder %s41, 0
      %p130 = por %p128, %p129
      %p131 = scmp.ne.s32.totalorder %s119, %s120
      %p132 = scmp.eq.s32.totalorder %s42, 1
      %p133 = por %p131, %p132
      %p135 = scmp.ne.s32.totalorder %s120, %s134
      %p136 = scmp.eq.s32.totalorder %s42, 0
      %p137 = por %p135, %p136
      %s139 = sadd.s32 %s138, 1
      %p142 = scmp.eq.s32.totalorder %s36, 1
      %p143 = scmp.ne.s32.totalorder %s138, %s140
      %p144 = scmp.eq.s32.totalorder %s36, 0
      %p145 = por %p143, %p144
      %p146 = scmp.ne.s32.totalorder %s138, %s140
      %p147 = scmp.eq.s32.totalorder %s41, 1
      %p148 = por %p146, %p147
      %p149 = scmp.ne.s32.totalorder %s140, %s141
      %p150 = scmp.eq.s32.totalorder %s41, 0
      %p151 = por %p149, %p150
      %p152 = scmp.ne.s32.totalorder %s140, %s141
      %p153 = scmp.eq.s32.totalorder %s42, 1
      %p154 = por %p152, %p153
      %p156 = scmp.ne.s32.totalorder %s141, %s155
      %p157 = scmp.eq.s32.totalorder %s42, 0
      %p158 = por %p156, %p157
      %s160 = sadd.s32 %s159, 1
      %p163 = scmp.eq.s32.totalorder %s36, 1
      %p164 = scmp.ne.s32.totalorder %s159, %s161
      %p165 = scmp.eq.s32.totalorder %s36, 0
      %p166 = por %p164, %p165
      %p167 = scmp.ne.s32.totalorder %s159, %s161
      %p168 = scmp.eq.s32.totalorder %s41, 1
      %p169 = por %p167, %p168
      %p170 = scmp.ne.s32.totalorder %s161, %s162
      %p171 = scmp.eq.s32.totalorder %s41, 0
      %p172 = por %p170, %p171
      %p173 = scmp.ne.s32.totalorder %s161, %s162
      %p174 = scmp.eq.s32.totalorder %s42, 1
      %p175 = por %p173, %p174
      %p177 = scmp.ne.s32.totalorder %s162, %s176
      %p178 = scmp.eq.s32.totalorder %s42, 0
      %p179 = por %p177, %p178
      %s181 = sadd.s32 %s180, 1
      %p184 = scmp.eq.s32.totalorder %s36, 1
      %p185 = scmp.ne.s32.totalorder %s180, %s182
      %p186 = scmp.eq.s32.totalorder %s36, 0
      %p187 = por %p185, %p186
      %p188 = scmp.ne.s32.totalorder %s180, %s182
      %p189 = scmp.eq.s32.totalorder %s41, 1
      %p190 = por %p188, %p189
      %p191 = scmp.ne.s32.totalorder %s182, %s183
      %p192 = scmp.eq.s32.totalorder %s41, 0
      %p193 = por %p191, %p192
      %p194 = scmp.ne.s32.totalorder %s182, %s183
      %p195 = scmp.eq.s32.totalorder %s42, 1
      %p196 = por %p194, %p195
      %p198 = scmp.ne.s32.totalorder %s183, %s197
      %p199 = scmp.eq.s32.totalorder %s42, 0
      %p200 = por %p198, %p199
      %s202 = sadd.s32 %s201, 1
      %p205 = scmp.eq.s32.totalorder %s36, 1
      %p206 = scmp.ne.s32.totalorder %s201, %s203
      %p207 = scmp.eq.s32.totalorder %s36, 0
      %p208 = por %p206, %p207
      %p209 = scmp.ne.s32.totalorder %s201, %s203
      %p210 = scmp.eq.s32.totalorder %s41, 1
      %p211 = por %p209, %p210
      %p212 = scmp.ne.s32.totalorder %s203, %s204
      %p213 = scmp.eq.s32.totalorder %s41, 0
      %p214 = por %p212, %p213
      %p215 = scmp.ne.s32.totalorder %s203, %s204
      %p216 = scmp.eq.s32.totalorder %s42, 1
      %p217 = por %p215, %p216
      %p219 = scmp.ne.s32.totalorder %s204, %s218
      %p220 = scmp.eq.s32.totalorder %s42, 0
      %p221 = por %p219, %p220
      %s223 = sadd.s32 %s222, 1
      %p226 = scmp.eq.s32.totalorder %s36, 1
      %p227 = scmp.ne.s32.totalorder %s222, %s224
      %p228 = scmp.eq.s32.totalorder %s36, 0
      %p229 = por %p227, %p228
      %p230 = scmp.ne.s32.totalorder %s222, %s224
      %p231 = scmp.eq.s32.totalorder %s41, 1
      %p232 = por %p230, %p231
      %p233 = scmp.ne.s32.totalorder %s224, %s225
      %p234 = scmp.eq.s32.totalorder %s41, 0
      %p235 = por %p233, %p234
      %p236 = scmp.ne.s32.totalorder %s224, %s225
      %p237 = scmp.eq.s32.totalorder %s42, 1
      %p238 = por %p236, %p237
      %p240 = scmp.ne.s32.totalorder %s225, %s239
      %p241 = scmp.eq.s32.totalorder %s42, 0
      %p242 = por %p240, %p241
      %s244 = sadd.s32 %s243, 1
      %p247 = scmp.eq.s32.totalorder %s36, 1
      %p248 = scmp.ne.s32.totalorder %s243, %s245
      %p249 = scmp.eq.s32.totalorder %s36, 0
      %p250 = por %p248, %p249
      %p251 = scmp.ne.s32.totalorder %s243, %s245
      %p252 = scmp.eq.s32.totalorder %s41, 1
      %p253 = por %p251, %p252
      %p254 = scmp.ne.s32.totalorder %s245, %s246
      %p255 = scmp.eq.s32.totalorder %s41, 0
      %p256 = por %p254, %p255
      %p257 = scmp.ne.s32.totalorder %s245, %s246
      %p258 = scmp.eq.s32.totalorder %s42, 1
      %p259 = por %p257, %p258
      %p261 = scmp.ne.s32.totalorder %s246, %s260
      %p262 = scmp.eq.s32.totalorder %s42, 0
      %p263 = por %p261, %p262
      %s265 = sadd.s32 %s264, 1
      %p268 = scmp.eq.s32.totalorder %s36, 1
      %p269 = scmp.ne.s32.totalorder %s264, %s266
      %p270 = scmp.eq.s32.totalorder %s36, 0
      %p271 = por %p269, %p270
      %p272 = scmp.ne.s32.totalorder %s264, %s266
      %p273 = scmp.eq.s32.totalorder %s41, 1
      %p274 = por %p272, %p273
      %p275 = scmp.ne.s32.totalorder %s266, %s267
      %p276 = scmp.eq.s32.totalorder %s41, 0
      %p277 = por %p275, %p276
      %p278 = scmp.ne.s32.totalorder %s266, %s267
      %p279 = scmp.eq.s32.totalorder %s42, 1
      %p280 = por %p278, %p279
      %p282 = scmp.ne.s32.totalorder %s267, %s281
      %p283 = scmp.eq.s32.totalorder %s42, 0
      %p284 = por %p282, %p283
      %s286 = sadd.s32 %s285, 1
      %p289 = scmp.eq.s32.totalorder %s36, 1
      %p290 = scmp.ne.s32.totalorder %s285, %s287
      %p291 = scmp.eq.s32.totalorder %s36, 0
      %p292 = por %p290, %p291
      %p293 = scmp.ne.s32.totalorder %s285, %s287
      %p294 = scmp.eq.s32.totalorder %s41, 1
      %p295 = por %p293, %p294
      %p296 = scmp.ne.s32.totalorder %s287, %s288
      %p297 = scmp.eq.s32.totalorder %s41, 0
      %p298 = por %p296, %p297
      %p299 = scmp.ne.s32.totalorder %s287, %s288
      %p300 = scmp.eq.s32.totalorder %s42, 1
      %p301 = por %p299, %p300
      %p303 = scmp.ne.s32.totalorder %s288, %s302
      %p304 = scmp.eq.s32.totalorder %s42, 0
      %p305 = por %p303, %p304
      %s307 = sadd.s32 %s306, 1
      %p310 = scmp.eq.s32.totalorder %s36, 1
      %p311 = scmp.ne.s32.totalorder %s306, %s308
      %p312 = scmp.eq.s32.totalorder %s36, 0
      %p313 = por %p311, %p312
      %p314 = scmp.ne.s32.totalorder %s306, %s308
      %p315 = scmp.eq.s32.totalorder %s41, 1
      %p316 = por %p314, %p315
      %p317 = scmp.ne.s32.totalorder %s308, %s309
      %p318 = scmp.eq.s32.totalorder %s41, 0
      %p319 = por %p317, %p318
      %p320 = scmp.ne.s32.totalorder %s308, %s309
      %p321 = scmp.eq.s32.totalorder %s42, 1
      %p322 = por %p320, %p321
      %p324 = scmp.ne.s32.totalorder %s309, %s323
      %p325 = scmp.eq.s32.totalorder %s42, 0
      %p326 = por %p324, %p325
      %s328 = sadd.s32 %s327, 1
      %p331 = scmp.eq.s32.totalorder %s36, 1
      %p332 = scmp.ne.s32.totalorder %s327, %s329
      %p333 = scmp.eq.s32.totalorder %s36, 0
      %p334 = por %p332, %p333
      %p335 = scmp.ne.s32.totalorder %s327, %s329
      %p336 = scmp.eq.s32.totalorder %s41, 1
      %p337 = por %p335, %p336
      %p338 = scmp.ne.s32.totalorder %s329, %s330
      %p339 = scmp.eq.s32.totalorder %s41, 0
      %p340 = por %p338, %p339
      %p341 = scmp.ne.s32.totalorder %s329, %s330
      %p342 = scmp.eq.s32.totalorder %s42, 1
      %p343 = por %p341, %p342
      %p345 = scmp.ne.s32.totalorder %s330, %s344
      %p346 = scmp.eq.s32.totalorder %s42, 0
      %p347 = por %p345, %p346
      %s349 = sadd.s32 %s348, 1
      %p352 = scmp.eq.s32.totalorder %s36, 1
      %p353 = scmp.ne.s32.totalorder %s348, %s350
      %p354 = scmp.eq.s32.totalorder %s36, 0
      %p355 = por %p353, %p354
      %p356 = scmp.ne.s32.totalorder %s348, %s350
      %p357 = scmp.eq.s32.totalorder %s41, 1
      %p358 = por %p356, %p357
      %p359 = scmp.ne.s32.totalorder %s350, %s351
      %p360 = scmp.eq.s32.totalorder %s41, 0
      %p361 = por %p359, %p360
      %p362 = scmp.ne.s32.totalorder %s350, %s351
      %p363 = scmp.eq.s32.totalorder %s42, 1
      %p364 = por %p362, %p363
      %p366 = scmp.ne.s32.totalorder %s351, %s365
      %p367 = scmp.eq.s32.totalorder %s42, 0
      %p368 = por %p366, %p367
      %s370 = sadd.s32 %s369, 1
      %p373 = scmp.eq.s32.totalorder %s36, 1
      %p374 = scmp.ne.s32.totalorder %s369, %s371
      %p375 = scmp.eq.s32.totalorder %s36, 0
      %p376 = por %p374, %p375
      %p377 = scmp.ne.s32.totalorder %s369, %s371
      %p378 = scmp.eq.s32.totalorder %s41, 1
      %p379 = por %p377, %p378
      %p380 = scmp.ne.s32.totalorder %s371, %s372
      %p381 = scmp.eq.s32.totalorder %s41, 0
      %p382 = por %p380, %p381
      %p383 = scmp.ne.s32.totalorder %s371, %s372
      %p384 = scmp.eq.s32.totalorder %s42, 1
      %p385 = por %p383, %p384
      %p387 = scmp.ne.s32.totalorder %s372, %s386
      %p388 = scmp.eq.s32.totalorder %s42, 0
      %p389 = por %p387, %p388
      %s391 = sadd.s32 %s390, 1
      %p394 = scmp.eq.s32.totalorder %s36, 1
      %p395 = scmp.ne.s32.totalorder %s390, %s392
      %p396 = scmp.eq.s32.totalorder %s36, 0
      %p397 = por %p395, %p396
      %p398 = scmp.ne.s32.totalorder %s390, %s392
      %p399 = scmp.eq.s32.totalorder %s41, 1
      %p400 = por %p398, %p399
      %p401 = scmp.ne.s32.totalorder %s392, %s393
      %p402 = scmp.eq.s32.totalorder %s41, 0
      %p403 = por %p401, %p402
      %p404 = scmp.ne.s32.totalorder %s392, %s393
      %p405 = scmp.eq.s32.totalorder %s42, 1
      %p406 = por %p404, %p405
      %p408 = scmp.ne.s32.totalorder %s393, %s407
      %p409 = scmp.eq.s32.totalorder %s42, 0
      %p410 = por %p408, %p409
      %s412 = sadd.s32 %s411, 1
      %p415 = scmp.eq.s32.totalorder %s36, 1
      %p416 = scmp.ne.s32.totalorder %s411, %s413
      %p417 = scmp.eq.s32.totalorder %s36, 0
      %p418 = por %p416, %p417
      %p419 = scmp.ne.s32.totalorder %s411, %s413
      %p420 = scmp.eq.s32.totalorder %s41, 1
      %p421 = por %p419, %p420
      %p422 = scmp.ne.s32.totalorder %s413, %s414
      %p423 = scmp.eq.s32.totalorder %s41, 0
      %p424 = por %p422, %p423
      %p425 = scmp.ne.s32.totalorder %s413, %s414
      %p426 = scmp.eq.s32.totalorder %s42, 1
      %p427 = por %p425, %p426
      %p429 = scmp.ne.s32.totalorder %s414, %s428
      %p430 = scmp.eq.s32.totalorder %s42, 0
      %p431 = por %p429, %p430
      %s433 = sadd.s32 %s432, 1
      %p436 = scmp.eq.s32.totalorder %s36, 1
      %p437 = scmp.ne.s32.totalorder %s432, %s434
      %p438 = scmp.eq.s32.totalorder %s36, 0
      %p439 = por %p437, %p438
      %p440 = scmp.ne.s32.totalorder %s432, %s434
      %p441 = scmp.eq.s32.totalorder %s41, 1
      %p442 = por %p440, %p441
      %p443 = scmp.ne.s32.totalorder %s434, %s435
      %p444 = scmp.eq.s32.totalorder %s41, 0
      %p445 = por %p443, %p444
      %p446 = scmp.ne.s32.totalorder %s434, %s435
      %p447 = scmp.eq.s32.totalorder %s42, 1
      %p448 = por %p446, %p447
      %p450 = scmp.ne.s32.totalorder %s435, %s449
      %p451 = scmp.eq.s32.totalorder %s42, 0
      %p452 = por %p450, %p451
      %s454 = sadd.s32 %s453, 1
      %p457 = scmp.eq.s32.totalorder %s36, 1
      %p458 = scmp.ne.s32.totalorder %s453, %s455
      %p459 = scmp.eq.s32.totalorder %s36, 0
      %p460 = por %p458, %p459
      %p461 = scmp.ne.s32.totalorder %s453, %s455
      %p462 = scmp.eq.s32.totalorder %s41, 1
      %p463 = por %p461, %p462
      %p464 = scmp.ne.s32.totalorder %s455, %s456
      %p465 = scmp.eq.s32.totalorder %s41, 0
      %p466 = por %p464, %p465
      %p467 = scmp.ne.s32.totalorder %s455, %s456
      %p468 = scmp.eq.s32.totalorder %s42, 1
      %p469 = por %p467, %p468
      %p471 = scmp.ne.s32.totalorder %s456, %s470
      %p472 = scmp.eq.s32.totalorder %s42, 0
      %p473 = por %p471, %p472
      %s475 = sadd.s32 %s474, 1
      %p478 = scmp.eq.s32.totalorder %s36, 1
      %p479 = scmp.ne.s32.totalorder %s474, %s476
      %p480 = scmp.eq.s32.totalorder %s36, 0
      %p481 = por %p479, %p480
      %p482 = scmp.ne.s32.totalorder %s474, %s476
      %p483 = scmp.eq.s32.totalorder %s41, 1
      %p484 = por %p482, %p483
      %p485 = scmp.ne.s32.totalorder %s476, %s477
      %p486 = scmp.eq.s32.totalorder %s41, 0
      %p487 = por %p485, %p486
      %p488 = scmp.ne.s32.totalorder %s476, %s477
      %p489 = scmp.eq.s32.totalorder %s42, 1
      %p490 = por %p488, %p489
      %p492 = scmp.ne.s32.totalorder %s477, %s491
      %p493 = scmp.eq.s32.totalorder %s42, 0
      %p494 = por %p492, %p493
      %s495 = ssub.s32 %s36, %s43
      %p496 = scmp.eq.s32.totalorder %s495, 0
      %s498 = sadd.s32 %s497, 1
      %s499 = scalar_select %p496, %s497, %s498
      %p502 = pneg %p496
      %p503 = scmp.eq.s32.totalorder %s36, 1
      %p504 = por %p502, %p503
      %p505 = scmp.ne.s32.totalorder %s497, %s500
      %p506 = scmp.eq.s32.totalorder %s36, 0
      %p507 = por %p505, %p506
      %p508 = scmp.ne.s32.totalorder %s497, %s500
      %p509 = scmp.eq.s32.totalorder %s41, 1
      %p510 = por %p508, %p509
      %p511 = scmp.ne.s32.totalorder %s500, %s501
      %p512 = scmp.eq.s32.totalorder %s41, 0
      %p513 = por %p511, %p512
      %p514 = scmp.ne.s32.totalorder %s500, %s501
      %p515 = scmp.eq.s32.totalorder %s42, 1
      %p516 = por %p514, %p515
      %p518 = scmp.ne.s32.totalorder %s501, %s517
      %p519 = scmp.eq.s32.totalorder %s42, 0
      %p520 = por %p518, %p519
      %s521 = ssub.s32 %s36, %s43
      %p522 = scmp.eq.s32.totalorder %s521, 0
      %s524 = sadd.s32 %s523, 1
      %s525 = scalar_select %p522, %s523, %s524
      %p528 = pneg %p522
      %p529 = scmp.eq.s32.totalorder %s36, 1
      %p530 = por %p528, %p529
      %p531 = scmp.ne.s32.totalorder %s523, %s526
      %p532 = scmp.eq.s32.totalorder %s36, 0
      %p533 = por %p531, %p532
      %p534 = scmp.ne.s32.totalorder %s523, %s526
      %p535 = scmp.eq.s32.totalorder %s41, 1
      %p536 = por %p534, %p535
      %p537 = scmp.ne.s32.totalorder %s526, %s527
      %p538 = scmp.eq.s32.totalorder %s41, 0
      %p539 = por %p537, %p538
      %p540 = scmp.ne.s32.totalorder %s526, %s527
      %p541 = scmp.eq.s32.totalorder %s42, 1
      %p542 = por %p540, %p541
      %p544 = scmp.ne.s32.totalorder %s527, %s543
      %p545 = scmp.eq.s32.totalorder %s42, 0
      %p546 = por %p544, %p545
      %s547 = ssub.s32 %s36, %s43
      %p548 = scmp.eq.s32.totalorder %s547, 0
      %s550 = sadd.s32 %s549, 1
      %s551 = scalar_select %p548, %s549, %s550
      %p554 = pneg %p548
      %p555 = scmp.eq.s32.totalorder %s36, 1
      %p556 = por %p554, %p555
      %p557 = scmp.ne.s32.totalorder %s549, %s552
      %p558 = scmp.eq.s32.totalorder %s36, 0
      %p559 = por %p557, %p558
      %p560 = scmp.ne.s32.totalorder %s549, %s552
      %p561 = scmp.eq.s32.totalorder %s41, 1
      %p562 = por %p560, %p561
      %p563 = scmp.ne.s32.totalorder %s552, %s553
      %p564 = scmp.eq.s32.totalorder %s41, 0
      %p565 = por %p563, %p564
      %p566 = scmp.ne.s32.totalorder %s552, %s553
      %p567 = scmp.eq.s32.totalorder %s42, 1
      %p568 = por %p566, %p567
      %p570 = scmp.ne.s32.totalorder %s553, %s569
      %p571 = scmp.eq.s32.totalorder %s42, 0
      %p572 = por %p570, %p571
      %p573 = scmp.le.s32.totalorder 1, %s36
      %p574 = scmp.lt.s32.totalorder %s36, 3
      %p575 = pnand %p573, %p574
      %p576 = pneg %p575
      // Predicated region
      $region9: #{decoder_vis_forward.1} parent=5 // pred_check
        _
      $region10: #{decoder_vis_forward.1} parent=5 // pred_check_branch
        %578 = sbr.rel (%p575) target = $region12
      $region11: #{decoder_vis_forward.1} parent=5 // pred_region
        %s579 = ssub.s32 %s36, 1
        // Predicated region
        $region13: #{decoder_vis_forward.1} parent=11 // pred_check
          %p580 = pneg %p109
        $region14: #{decoder_vis_forward.1} parent=11 // pred_check_branch
          %582 = sbr.rel (%p580) target = $region16
        $region15: #{decoder_vis_forward.1} parent=11 // pred_region
          _
        $region16: #{decoder_vis_forward.1} parent=11 // pred_fallthru
          _
        // Predicated region
        $region17: #{decoder_vis_forward.1} parent=11 // pred_check
          %p583 = pneg %p130
        $region18: #{decoder_vis_forward.1} parent=11 // pred_check_branch
          %585 = sbr.rel (%p583) target = $region20
        $region19: #{decoder_vis_forward.1} parent=11 // pred_region
          _
        $region20: #{decoder_vis_forward.1} parent=11 // pred_fallthru
          _
        // Predicated region
        $region21: #{decoder_vis_forward.1} parent=11 // pred_check
          %p586 = pneg %p151
        $region22: #{decoder_vis_forward.1} parent=11 // pred_check_branch
          %588 = sbr.rel (%p586) target = $region24
        $region23: #{decoder_vis_forward.1} parent=11 // pred_region
          _
        $region24: #{decoder_vis_forward.1} parent=11 // pred_fallthru
          _
        // Predicated region
        $region25: #{decoder_vis_forward.1} parent=11 // pred_check
          %p589 = pneg %p172
        $region26: #{decoder_vis_forward.1} parent=11 // pred_check_branch
          %591 = sbr.rel (%p589) target = $region28
        $region27: #{decoder_vis_forward.1} parent=11 // pred_region
          _
        $region28: #{decoder_vis_forward.1} parent=11 // pred_fallthru
          _
        // Predicated region
        $region29: #{decoder_vis_forward.1} parent=11 // pred_check
          %p592 = pneg %p193
        $region30: #{decoder_vis_forward.1} parent=11 // pred_check_branch
          %594 = sbr.rel (%p592) target = $region32
        $region31: #{decoder_vis_forward.1} parent=11 // pred_region
          _
        $region32: #{decoder_vis_forward.1} parent=11 // pred_fallthru
          _
        // Predicated region
        $region33: #{decoder_vis_forward.1} parent=11 // pred_check
          %p595 = pneg %p214
        $region34: #{decoder_vis_forward.1} parent=11 // pred_check_branch
          %597 = sbr.rel (%p595) target = $region36
        $region35: #{decoder_vis_forward.1} parent=11 // pred_region
          _
        $region36: #{decoder_vis_forward.1} parent=11 // pred_fallthru
          _
        // Predicated region
        $region37: #{decoder_vis_forward.1} parent=11 // pred_check
          %p598 = pneg %p235
        $region38: #{decoder_vis_forward.1} parent=11 // pred_check_branch
          %600 = sbr.rel (%p598) target = $region40
        $region39: #{decoder_vis_forward.1} parent=11 // pred_region
          _
        $region40: #{decoder_vis_forward.1} parent=11 // pred_fallthru
          _
        // Predicated region
        $region41: #{decoder_vis_forward.1} parent=11 // pred_check
          %p601 = pneg %p256
        $region42: #{decoder_vis_forward.1} parent=11 // pred_check_branch
          %603 = sbr.rel (%p601) target = $region44
        $region43: #{decoder_vis_forward.1} parent=11 // pred_region
          _
        $region44: #{decoder_vis_forward.1} parent=11 // pred_fallthru
          _
        // Predicated region
        $region45: #{decoder_vis_forward.1} parent=11 // pred_check
          %p604 = pneg %p277
        $region46: #{decoder_vis_forward.1} parent=11 // pred_check_branch
          %606 = sbr.rel (%p604) target = $region48
        $region47: #{decoder_vis_forward.1} parent=11 // pred_region
          _
        $region48: #{decoder_vis_forward.1} parent=11 // pred_fallthru
          _
        // Predicated region
        $region49: #{decoder_vis_forward.1} parent=11 // pred_check
          %p607 = pneg %p298
        $region50: #{decoder_vis_forward.1} parent=11 // pred_check_branch
          %609 = sbr.rel (%p607) target = $region52
        $region51: #{decoder_vis_forward.1} parent=11 // pred_region
          _
        $region52: #{decoder_vis_forward.1} parent=11 // pred_fallthru
          _
        // Predicated region
        $region53: #{decoder_vis_forward.1} parent=11 // pred_check
          %p610 = pneg %p319
        $region54: #{decoder_vis_forward.1} parent=11 // pred_check_branch
          %612 = sbr.rel (%p610) target = $region56
        $region55: #{decoder_vis_forward.1} parent=11 // pred_region
          _
        $region56: #{decoder_vis_forward.1} parent=11 // pred_fallthru
          _
        // Predicated region
        $region57: #{decoder_vis_forward.1} parent=11 // pred_check
          %p613 = pneg %p340
        $region58: #{decoder_vis_forward.1} parent=11 // pred_check_branch
          %615 = sbr.rel (%p613) target = $region60
        $region59: #{decoder_vis_forward.1} parent=11 // pred_region
          _
        $region60: #{decoder_vis_forward.1} parent=11 // pred_fallthru
          _
        // Predicated region
        $region61: #{decoder_vis_forward.1} parent=11 // pred_check
          %p616 = pneg %p361
        $region62: #{decoder_vis_forward.1} parent=11 // pred_check_branch
          %618 = sbr.rel (%p616) target = $region64
        $region63: #{decoder_vis_forward.1} parent=11 // pred_region
          _
        $region64: #{decoder_vis_forward.1} parent=11 // pred_fallthru
          _
        // Predicated region
        $region65: #{decoder_vis_forward.1} parent=11 // pred_check
          %p619 = pneg %p382
        $region66: #{decoder_vis_forward.1} parent=11 // pred_check_branch
          %621 = sbr.rel (%p619) target = $region68
        $region67: #{decoder_vis_forward.1} parent=11 // pred_region
          _
        $region68: #{decoder_vis_forward.1} parent=11 // pred_fallthru
          _
        // Predicated region
        $region69: #{decoder_vis_forward.1} parent=11 // pred_check
          %p622 = pneg %p403
        $region70: #{decoder_vis_forward.1} parent=11 // pred_check_branch
          %624 = sbr.rel (%p622) target = $region72
        $region71: #{decoder_vis_forward.1} parent=11 // pred_region
          _
        $region72: #{decoder_vis_forward.1} parent=11 // pred_fallthru
          _
        // Predicated region
        $region73: #{decoder_vis_forward.1} parent=11 // pred_check
          %p625 = pneg %p424
        $region74: #{decoder_vis_forward.1} parent=11 // pred_check_branch
          %627 = sbr.rel (%p625) target = $region76
        $region75: #{decoder_vis_forward.1} parent=11 // pred_region
          _
        $region76: #{decoder_vis_forward.1} parent=11 // pred_fallthru
          _
        // Predicated region
        $region77: #{decoder_vis_forward.1} parent=11 // pred_check
          %p628 = pneg %p445
        $region78: #{decoder_vis_forward.1} parent=11 // pred_check_branch
          %630 = sbr.rel (%p628) target = $region80
        $region79: #{decoder_vis_forward.1} parent=11 // pred_region
          _
        $region80: #{decoder_vis_forward.1} parent=11 // pred_fallthru
          _
        // Predicated region
        $region81: #{decoder_vis_forward.1} parent=11 // pred_check
          %p631 = pneg %p466
        $region82: #{decoder_vis_forward.1} parent=11 // pred_check_branch
          %633 = sbr.rel (%p631) target = $region84
        $region83: #{decoder_vis_forward.1} parent=11 // pred_region
          _
        $region84: #{decoder_vis_forward.1} parent=11 // pred_fallthru
          _
        // Predicated region
        $region85: #{decoder_vis_forward.1} parent=11 // pred_check
          %p634 = pneg %p487
        $region86: #{decoder_vis_forward.1} parent=11 // pred_check_branch
          %636 = sbr.rel (%p634) target = $region88
        $region87: #{decoder_vis_forward.1} parent=11 // pred_region
          _
        $region88: #{decoder_vis_forward.1} parent=11 // pred_fallthru
          _
      $region12: #{decoder_vis_forward.1} parent=5 // pred_fallthru
        _
      %p637 = scmp.lt.s32.totalorder %s36, 2
      // Predicated region
      $region89: #{decoder_vis_forward.1} parent=5 // pred_check
        %p638 = pneg %p637
      $region90: #{decoder_vis_forward.1} parent=5 // pred_check_branch
        %640 = sbr.rel (%p638) target = $region92
      $region91: #{decoder_vis_forward.1} parent=5 // pred_region
        // Predicated region
        $region93: #{decoder_vis_forward.1} parent=91 // pred_check
          %p641 = pneg %p56
        $region94: #{decoder_vis_forward.1} parent=91 // pred_check_branch
          %643 = sbr.rel (%p641) target = $region96
        $region95: #{decoder_vis_forward.1} parent=91 // pred_region
          %p644 = scmp.lt.s32.totalorder %s36, 1
          %s645 = scalar_select %p644, %s36, 1
          %s646 = smul.addr %s645, 2
          %s647 = smul.addr %s646, 8
          %s648 = scalar_lea.vmem %s0, %s647
        $region96: #{decoder_vis_forward.1} parent=91 // pred_fallthru
          _
        // Predicated region
        $region97: #{decoder_vis_forward.1} parent=91 // pred_check
          %p649 = pneg %p82
        $region98: #{decoder_vis_forward.1} parent=91 // pred_check_branch
          %651 = sbr.rel (%p649) target = $region100
        $region99: #{decoder_vis_forward.1} parent=91 // pred_region
          %p652 = scmp.lt.s32.totalorder %s36, 1
          %s653 = scalar_select %p652, %s36, 1
          %s654 = smul.addr %s653, 2
          %s655 = smul.addr %s654, 8
          %s656 = scalar_lea.vmem %s1, %s655
        $region100: #{decoder_vis_forward.1} parent=91 // pred_fallthru
          _
      $region92: #{decoder_vis_forward.1} parent=5 // pred_fallthru
        _
      %p657 = scmp.le.s32.totalorder 1, %s36
      %p658 = scmp.lt.s32.totalorder %s36, 3
      %p659 = pnand %p657, %p658
      %p660 = pneg %p659
      // Predicated region
      $region101: #{decoder_vis_forward.1} parent=5 // pred_check
        _
      $region102: #{decoder_vis_forward.1} parent=5 // pred_check_branch
        %662 = sbr.rel (%p659) target = $region104
      $region103: #{decoder_vis_forward.1} parent=5 // pred_region
        %s663 = ssub.s32 %s36, 1
        %p664 = scmp.lt.s32.totalorder %s41, 1
        %s665 = scalar_select %p664, %s41, 1
        %s666 = smul.addr %s665, 2
        %s667 = smul.addr %s666, 8
        %s668 = scalar_lea.vmem %s0, %s667
        %p669 = pneg %p62
        %p670 = pneg %p59
        %p671 = scmp.lt.s32.totalorder %s41, 1
        %s672 = scalar_select %p671, %s41, 1
        %s673 = smul.addr %s672, 2
        %s674 = smul.addr %s673, 8
        %s675 = scalar_lea.vmem %s1, %s674
        %p676 = pneg %p88
        %p677 = pneg %p85
        %p678 = pneg %p109
        %p679 = pneg %p106
        %p680 = pneg %p130
        %p681 = pneg %p127
        %p682 = pneg %p151
        %p683 = pneg %p148
        %p684 = pneg %p172
        %p685 = pneg %p169
        %p686 = pneg %p193
        %p687 = pneg %p190
        %p688 = pneg %p214
        %p689 = pneg %p211
        %p690 = pneg %p235
        %p691 = pneg %p232
        %p692 = pneg %p256
        %p693 = pneg %p253
        %p694 = pneg %p277
        %p695 = pneg %p274
        %p696 = pneg %p298
        %p697 = pneg %p295
        %p698 = pneg %p319
        %p699 = pneg %p316
        %p700 = pneg %p340
        %p701 = pneg %p337
        %p702 = pneg %p361
        %p703 = pneg %p358
        %p704 = pneg %p382
        %p705 = pneg %p379
        %p706 = pneg %p403
        %p707 = pneg %p400
        %p708 = pneg %p424
        %p709 = pneg %p421
        %p710 = pneg %p445
        %p711 = pneg %p442
        %p712 = pneg %p466
        %p713 = pneg %p463
        %p714 = pneg %p487
        %p715 = pneg %p484
        %p716 = pneg %p513
        %p717 = pneg %p510
        %s718 = sand.u32 %s500, 1
        %s719 = sand.u32 %s500, 1
        %s720 = smul.addr %s719, 64
        %s721 = scalar_lea.vmem [#allocation2], %s720
        %p722 = pneg %p539
        %p723 = pneg %p536
        %s724 = sand.u32 %s526, 1
        %s725 = scalar_lea.sflag [#allocation4], %s724
        %s726 = sand.u32 %s526, 1
        %s727 = smul.addr %s726, 64
        %s728 = scalar_lea.vmem [#allocation3], %s727
        %p729 = pneg %p565
        %p730 = pneg %p562
        %s731 = sand.u32 %s552, 1
        %s732 = scalar_lea.sflag [#allocation6], %s731
        %s733 = sand.u32 %s552, 1
        %s734 = smul.addr %s733, 64
        %s735 = scalar_lea.vmem [#allocation5], %s734
        %p736 = scmp.lt.s32.totalorder %s41, 1
        %s737 = scalar_select %p736, %s41, 1
        %s738 = smul.addr %s737, 2
        %s739 = smul.addr %s738, 8
        %s740 = scalar_lea.vmem %s0, %s739
        %p741 = scmp.lt.s32.totalorder %s41, 1
        %s742 = scalar_select %p741, %s41, 1
        %s743 = smul.addr %s742, 2
        %s744 = smul.addr %s743, 8
        %s745 = scalar_lea.vmem %s1, %s744
        %v746 = vld [vmem:[%s2] sm:$0x7]
        %v747 = vld [vmem:[%s4] sm:$0xf]
        %v748 = vld [vmem:[%s6] sm:$0xf]
        %v749 = vld [vmem:[%s7] sm:$0xff]
        %v750 = vld [vmem:[%s7 + $0x8] sm:$0xff]
        %v751 = vld [vmem:[%s7 + $0x10] sm:$0xff]
        %v752 = vld [vmem:[%s7 + $0x18] sm:$0xff]
        %v753 = vld [vmem:[%s8] sm:$0xff]
        %v754 = vld [vmem:[%s9] sm:$0xff]
        %v755 = vld [vmem:[%s10] sm:$0xff]
        %v756 = vld [vmem:[%s10 + $0x8] sm:$0xff]
        %v757 = vld [vmem:[%s11] sm:$0xff]
        %v758 = vld [vmem:[%s11 + $0x8] sm:$0xff]
        %v759 = vld [vmem:[%s12] sm:$0xff]
        %v760 = vld [vmem:[%s12 + $0x8] sm:$0xff]
        %v761 = vld [vmem:[%s14] sm:$0xff]
        %v762 = vld [vmem:[%s14 + $0x8] sm:$0xff]
        %v763 = vld [vmem:[%s16] sm:$0xff]
        %v764 = vld [vmem:[%s16 + $0x8] sm:$0xff]
        %v765 = vld [vmem:[%s17] sm:$0xf]
        %v766 = vld [vmem:[%s19] sm:$0xf]
        %v767 = vld [vmem:[%s3] sm:$0x1]
        %v769 = vlaneseq
        %v770 = vshrl.u32 %v769, 7
        %v771 = vsub.s32 0, %v770
        %v772 = vrot.slane %v767, %v771
        %v774 = vld [vmem:[%s5] sm:$0x1]
        %v776 = vlaneseq
        %v777 = vshrl.u32 %v776, 7
        %v778 = vsub.s32 0, %v777
        %v779 = vrot.slane %v774, %v778
        %v781 = vld [vmem:[%s13] sm:$0x1]
        %v783 = vlaneseq
        %v784 = vshrl.u32 %v783, 7
        %v785 = vsub.s32 0, %v784
        %v786 = vrot.slane %v781, %v785
        %v788 = vld [vmem:[%s15] sm:$0x1]
        %v790 = vlaneseq
        %v791 = vshrl.u32 %v790, 7
        %v792 = vsub.s32 0, %v791
        %v793 = vrot.slane %v788, %v792
        %v795 = vld [vmem:[%s18] sm:$0x1]
        %v797 = vlaneseq
        %v798 = vshrl.u32 %v797, 7
        %v799 = vsub.s32 0, %v798
        %v800 = vrot.slane %v795, %v799
        %v802 = vld [vmem:[%s20] sm:$0x1]
        %v804 = vlaneseq
        %v805 = vshrl.u32 %v804, 7
        %v806 = vsub.s32 0, %v805
        %v807 = vrot.slane %v802, %v806
        %v809 = vld [vmem:[%s740] sm:$0xff]
        %v810 = vld [vmem:[%s740 + $0x8] sm:$0xff]
        %v811 = vld [vmem:[%s745] sm:$0xff]
        %v812 = vld [vmem:[%s745 + $0x8] sm:$0xff]
        loop: start=0, step=1, limit=4
        $region105: #{decoder_vis_forward.1} parent=103 // loop_pre_header
          _
        $region106: #{decoder_vis_forward.1} parent=103 // loop_header
          %s814 = sphi 0, %s818
          %p815 = scmp.ge.s32.totalorder %s814, 4
          %v819 = vphi %v809, %v2177
          %v820 = vphi %v810, %v2178
          %v821 = vphi %v811, %v1980
          %v822 = vphi %v812, %v1981
        $region107: #{decoder_vis_forward.1} parent=103 // loop_header_branch
          %817 = sbr.rel (%p815) target = $region111
        $region108: #{decoder_vis_forward.1} parent=103 // loop_body
          %vm823 = vcmask 23552
          %v825 = vsel %vm823, %v819, 0
          %v828 = vsel %vm823, %v820, 0
          %vm830 = vcmask 1042432
          %v832 = vsel %vm830, %v746, 0
          %834 = vmatprep.subr.mxu0 0.0
          %835 = vmatpush1.msra.mxu0 %v832
          %836 = vmatprep.subr.mxu0 0.0
          %837 = vmatpush1.msra.mxu0 0.0
          %838 = vmatprep.subr.mxu0 0.0
          %839 = vmatpush1.msra.mxu0 0.0
          %840 = vmatprep.subr.mxu0 0.0
          %841 = vmatpush1.msra.mxu0 0.0
          %842 = vmatprep.subr.mxu0 0.0
          %843 = vmatpush1.msra.mxu0 0.0
          %844 = vmatprep.subr.mxu0 0.0
          %845 = vmatpush1.msra.mxu0 0.0
          %846 = vmatprep.subr.mxu0 0.0
          %847 = vmatpush1.msra.mxu0 0.0
          %848 = vmatprep.subr.mxu0 0.0
          %849 = vmatpush1.msra.mxu0 0.0
          %850 = vmatprep.subr.mxu0 0.0
          %851 = vmatpush1.msra.mxu0 0.0
          %852 = vmatprep.subr.mxu0 0.0
          %853 = vmatpush1.msra.mxu0 0.0
          %854 = vmatprep.subr.mxu0 0.0
          %855 = vmatpush1.msra.mxu0 0.0
          %856 = vmatprep.subr.mxu0 0.0
          %857 = vmatpush1.msra.mxu0 0.0
          %858 = vmatprep.subr.mxu0 0.0
          %859 = vmatpush1.msra.mxu0 0.0
          %860 = vmatprep.subr.mxu0 0.0
          %861 = vmatpush1.msra.mxu0 0.0
          %862 = vmatprep.subr.mxu0 0.0
          %863 = vmatpush1.msra.mxu0 0.0
          %864 = vmatprep.subr.mxu0 0.0
          %865 = vmatpush1.msra.mxu0 0.0
          %866 = vmatprep.subr.mxu0 0.0
          %867 = vmatpush1.msra.mxu0 0.0
          %868 = vmatprep.subr.mxu0 0.0
          %869 = vmatpush1.msra.mxu0 0.0
          %870 = vmatprep.subr.mxu0 0.0
          %871 = vmatpush1.msra.mxu0 0.0
          %872 = vmatprep.subr.mxu0 0.0
          %873 = vmatpush1.msra.mxu0 0.0
          %874 = vmatprep.subr.mxu0 0.0
          %875 = vmatpush1.msra.mxu0 0.0
          %876 = vmatprep.subr.mxu0 0.0
          %877 = vmatpush1.msra.mxu0 0.0
          %878 = vmatprep.subr.mxu0 0.0
          %879 = vmatpush1.msra.mxu0 0.0
          %880 = vmatprep.subr.mxu0 0.0
          %881 = vmatpush1.msra.mxu0 0.0
          %882 = vmatprep.subr.mxu0 0.0
          %883 = vmatpush1.msra.mxu0 0.0
          %884 = vmatprep.subr.mxu0 0.0
          %885 = vmatpush1.msra.mxu0 0.0
          %886 = vmatprep.subr.mxu0 0.0
          %887 = vmatpush1.msra.mxu0 0.0
          %888 = vmatprep.subr.mxu0 0.0
          %889 = vmatpush1.msra.mxu0 0.0
          %890 = vmatprep.subr.mxu0 0.0
          %891 = vmatpush1.msra.mxu0 0.0
          %892 = vmatprep.subr.mxu0 0.0
          %893 = vmatpush1.msra.mxu0 0.0
          %894 = vmatprep.subr.mxu0 0.0
          %895 = vmatpush1.msra.mxu0 0.0
          %896 = vmatprep.subr.mxu0 0.0
          %897 = vmatpush1.msra.mxu0 0.0
          %898 = vmatprep.mubr.f32.mxu0 0.0
          %899 = vmatmul.mubr.f32.gmra.mrb[0].mxu0 %v825
          %v900 = vpop.f32.mrb[0].mxu0
          %v901 = vadd.f32 0.0, %v900
          %v902 = vpop.f32.mrb[0].mxu0
          %903 = vmatprep.mubr.f32.mxu0 0.0
          %904 = vmatmul.mubr.f32.gmra.mrb[0].mxu0 %v828
          %v905 = vpop.f32.mrb[0].mxu0
          %v906 = vadd.f32 0.0, %v905
          %v907 = vpop.f32.mrb[0].mxu0
          %908 = vdwg.mxu0
          %v909 = vadd.f32 %v901, %v772
          %v910 = vadd.f32 %v906, %v772
          %vm911 = vcmask 31744
          %v913 = vsel %vm911, %v821, 0
          %v916 = vsel %vm911, %v822, 0
          %vm918 = vcmask 1043456
          %v920 = vsel %vm918, %v747, 0
          %922 = vmatprep.subr.mxu0 0.0
          %923 = vmatpush1.msra.mxu0 %v920
          %924 = vmatprep.subr.mxu0 0.0
          %925 = vmatpush1.msra.mxu0 0.0
          %926 = vmatprep.subr.mxu0 0.0
          %927 = vmatpush1.msra.mxu0 0.0
          %928 = vmatprep.subr.mxu0 0.0
          %929 = vmatpush1.msra.mxu0 0.0
          %930 = vmatprep.subr.mxu0 0.0
          %931 = vmatpush1.msra.mxu0 0.0
          %932 = vmatprep.subr.mxu0 0.0
          %933 = vmatpush1.msra.mxu0 0.0
          %934 = vmatprep.subr.mxu0 0.0
          %935 = vmatpush1.msra.mxu0 0.0
          %936 = vmatprep.subr.mxu0 0.0
          %937 = vmatpush1.msra.mxu0 0.0
          %938 = vmatprep.subr.mxu0 0.0
          %939 = vmatpush1.msra.mxu0 0.0
          %940 = vmatprep.subr.mxu0 0.0
          %941 = vmatpush1.msra.mxu0 0.0
          %942 = vmatprep.subr.mxu0 0.0
          %943 = vmatpush1.msra.mxu0 0.0
          %944 = vmatprep.subr.mxu0 0.0
          %945 = vmatpush1.msra.mxu0 0.0
          %946 = vmatprep.subr.mxu0 0.0
          %947 = vmatpush1.msra.mxu0 0.0
          %948 = vmatprep.subr.mxu0 0.0
          %949 = vmatpush1.msra.mxu0 0.0
          %950 = vmatprep.subr.mxu0 0.0
          %951 = vmatpush1.msra.mxu0 0.0
          %952 = vmatprep.subr.mxu0 0.0
          %953 = vmatpush1.msra.mxu0 0.0
          %954 = vmatprep.subr.mxu0 0.0
          %955 = vmatpush1.msra.mxu0 0.0
          %956 = vmatprep.subr.mxu0 0.0
          %957 = vmatpush1.msra.mxu0 0.0
          %958 = vmatprep.subr.mxu0 0.0
          %959 = vmatpush1.msra.mxu0 0.0
          %960 = vmatprep.subr.mxu0 0.0
          %961 = vmatpush1.msra.mxu0 0.0
          %962 = vmatprep.subr.mxu0 0.0
          %963 = vmatpush1.msra.mxu0 0.0
          %964 = vmatprep.subr.mxu0 0.0
          %965 = vmatpush1.msra.mxu0 0.0
          %966 = vmatprep.subr.mxu0 0.0
          %967 = vmatpush1.msra.mxu0 0.0
          %968 = vmatprep.subr.mxu0 0.0
          %969 = vmatpush1.msra.mxu0 0.0
          %970 = vmatprep.subr.mxu0 0.0
          %971 = vmatpush1.msra.mxu0 0.0
          %972 = vmatprep.subr.mxu0 0.0
          %973 = vmatpush1.msra.mxu0 0.0
          %974 = vmatprep.subr.mxu0 0.0
          %975 = vmatpush1.msra.mxu0 0.0
          %976 = vmatprep.subr.mxu0 0.0
          %977 = vmatpush1.msra.mxu0 0.0
          %978 = vmatprep.subr.mxu0 0.0
          %979 = vmatpush1.msra.mxu0 0.0
          %980 = vmatprep.subr.mxu0 0.0
          %981 = vmatpush1.msra.mxu0 0.0
          %982 = vmatprep.subr.mxu0 0.0
          %983 = vmatpush1.msra.mxu0 0.0
          %984 = vmatprep.subr.mxu0 0.0
          %985 = vmatpush1.msra.mxu0 0.0
          %986 = vmatprep.mubr.f32.mxu0 0.0
          %987 = vmatmul.mubr.f32.gmra.mrb[0].mxu0 %v913
          %v988 = vpop.f32.mrb[0].mxu0
          %v989 = vadd.f32 0.0, %v988
          %v990 = vpop.f32.mrb[0].mxu0
          %991 = vmatprep.mubr.f32.mxu0 0.0
          %992 = vmatmul.mubr.f32.gmra.mrb[0].mxu0 %v916
          %v993 = vpop.f32.mrb[0].mxu0
          %v994 = vadd.f32 0.0, %v993
          %v995 = vpop.f32.mrb[0].mxu0
          %996 = vdwg.mxu0
          %999 = vrot.lane.b32.xlu0 %v989, 4
          %v1000 = vpop.permute.xlu0 %999
          %1001 = vrot.lane.b32.xlu0 %v994, 4
          %v1002 = vpop.permute.xlu0 %1001
          %v1005 = vadd.f32 %v901, %v1000
          %v1006 = vadd.f32 %v906, %v1002
          %v1008 = vsel %vm911, %v909, 0
          %v1011 = vsel %vm911, %v910, 0
          %v1014 = vsel %vm918, %v748, 0
          %1016 = vmatprep.subr.mxu0 0.0
          %1017 = vmatpush1.msra.mxu0 %v1014
          %1018 = vmatprep.subr.mxu0 0.0
          %1019 = vmatpush1.msra.mxu0 0.0
          %1020 = vmatprep.subr.mxu0 0.0
          %1021 = vmatpush1.msra.mxu0 0.0
          %1022 = vmatprep.subr.mxu0 0.0
          %1023 = vmatpush1.msra.mxu0 0.0
          %1024 = vmatprep.subr.mxu0 0.0
          %1025 = vmatpush1.msra.mxu0 0.0
          %1026 = vmatprep.subr.mxu0 0.0
          %1027 = vmatpush1.msra.mxu0 0.0
          %1028 = vmatprep.subr.mxu0 0.0
          %1029 = vmatpush1.msra.mxu0 0.0
          %1030 = vmatprep.subr.mxu0 0.0
          %1031 = vmatpush1.msra.mxu0 0.0
          %1032 = vmatprep.subr.mxu0 0.0
          %1033 = vmatpush1.msra.mxu0 0.0
          %1034 = vmatprep.subr.mxu0 0.0
          %1035 = vmatpush1.msra.mxu0 0.0
          %1036 = vmatprep.subr.mxu0 0.0
          %1037 = vmatpush1.msra.mxu0 0.0
          %1038 = vmatprep.subr.mxu0 0.0
          %1039 = vmatpush1.msra.mxu0 0.0
          %1040 = vmatprep.subr.mxu0 0.0
          %1041 = vmatpush1.msra.mxu0 0.0
          %1042 = vmatprep.subr.mxu0 0.0
          %1043 = vmatpush1.msra.mxu0 0.0
          %1044 = vmatprep.subr.mxu0 0.0
          %1045 = vmatpush1.msra.mxu0 0.0
          %1046 = vmatprep.subr.mxu0 0.0
          %1047 = vmatpush1.msra.mxu0 0.0
          %1048 = vmatprep.subr.mxu0 0.0
          %1049 = vmatpush1.msra.mxu0 0.0
          %1050 = vmatprep.subr.mxu0 0.0
          %1051 = vmatpush1.msra.mxu0 0.0
          %1052 = vmatprep.subr.mxu0 0.0
          %1053 = vmatpush1.msra.mxu0 0.0
          %1054 = vmatprep.subr.mxu0 0.0
          %1055 = vmatpush1.msra.mxu0 0.0
          %1056 = vmatprep.subr.mxu0 0.0
          %1057 = vmatpush1.msra.mxu0 0.0
          %1058 = vmatprep.subr.mxu0 0.0
          %1059 = vmatpush1.msra.mxu0 0.0
          %1060 = vmatprep.subr.mxu0 0.0
          %1061 = vmatpush1.msra.mxu0 0.0
          %1062 = vmatprep.subr.mxu0 0.0
          %1063 = vmatpush1.msra.mxu0 0.0
          %1064 = vmatprep.subr.mxu0 0.0
          %1065 = vmatpush1.msra.mxu0 0.0
          %1066 = vmatprep.subr.mxu0 0.0
          %1067 = vmatpush1.msra.mxu0 0.0
          %1068 = vmatprep.subr.mxu0 0.0
          %1069 = vmatpush1.msra.mxu0 0.0
          %1070 = vmatprep.subr.mxu0 0.0
          %1071 = vmatpush1.msra.mxu0 0.0
          %1072 = vmatprep.subr.mxu0 0.0
          %1073 = vmatpush1.msra.mxu0 0.0
          %1074 = vmatprep.subr.mxu0 0.0
          %1075 = vmatpush1.msra.mxu0 0.0
          %1076 = vmatprep.subr.mxu0 0.0
          %1077 = vmatpush1.msra.mxu0 0.0
          %1078 = vmatprep.subr.mxu0 0.0
          %1079 = vmatpush1.msra.mxu0 0.0
          %1080 = vmatprep.mubr.f32.mxu0 0.0
          %1081 = vmatmul.mubr.f32.gmra.mrb[0].mxu0 %v1008
          %v1082 = vpop.f32.mrb[0].mxu0
          %v1083 = vadd.f32 0.0, %v1082
          %v1084 = vpop.f32.mrb[0].mxu0
          %1085 = vmatprep.mubr.f32.mxu0 0.0
          %1086 = vmatmul.mubr.f32.gmra.mrb[0].mxu0 %v1011
          %v1087 = vpop.f32.mrb[0].mxu0
          %v1088 = vadd.f32 0.0, %v1087
          %v1089 = vpop.f32.mrb[0].mxu0
          %1090 = vdwg.mxu0
          %1091 = vrot.lane.b32.xlu0 %v989, 120
          %v1092 = vpop.permute.xlu0 %1091
          %1093 = vrot.lane.b32.xlu0 %v994, 120
          %v1094 = vpop.permute.xlu0 %1093
          %v1097 = vadd.f32 %v1083, %v1092
          %v1098 = vadd.f32 %v1088, %v1094
          %v1099 = vadd.f32 %v1097, %v779
          %v1100 = vadd.f32 %v1098, %v779
          %v1101 = vtanh.pop %v1099
          %v1102 = vtanh.pop %v1100
          %v1103 = vmul.f32 %v1101, 0.5
          %v1104 = vmul.f32 %v1102, 0.5
          %1105 = vrot.lane.b32.xlu0 %v821, 4
          %v1106 = vpop.permute.xlu0 %1105
          %1107 = vrot.lane.b32.xlu0 %v822, 4
          %v1108 = vpop.permute.xlu0 %1107
          %v1111 = vsel %vm911, %v909, %v1106
          %v1112 = vsel %vm911, %v910, %v1108
          %vm1113 = vcmask 130048
          %v1115 = vsel %vm1113, %v749, 0
          %v1118 = vsel %vm1113, %v750, 0
          %v1121 = vsel %vm1113, %v751, 0
          %v1124 = vsel %vm1113, %v752, 0
          %1126 = vmatprep.subr.mxu0 0.0
          %1127 = vmatpush1.msra.mxu0 %v1111
          %1128 = vmatprep.subr.mxu0 0.0
          %1129 = vmatpush1.msra.mxu0 %v1112
          %1130 = vmatprep.subr.mxu0 0.0
          %1131 = vmatpush1.msra.mxu0 0.0
          %1132 = vmatprep.subr.mxu0 0.0
          %1133 = vmatpush1.msra.mxu0 0.0
          %1134 = vmatprep.subr.mxu0 0.0
          %1135 = vmatpush1.msra.mxu0 0.0
          %1136 = vmatprep.subr.mxu0 0.0
          %1137 = vmatpush1.msra.mxu0 0.0
          %1138 = vmatprep.subr.mxu0 0.0
          %1139 = vmatpush1.msra.mxu0 0.0
          %1140 = vmatprep.subr.mxu0 0.0
          %1141 = vmatpush1.msra.mxu0 0.0
          %1142 = vmatprep.subr.mxu0 0.0
          %1143 = vmatpush1.msra.mxu0 0.0
          %1144 = vmatprep.subr.mxu0 0.0
          %1145 = vmatpush1.msra.mxu0 0.0
          %1146 = vmatprep.subr.mxu0 0.0
          %1147 = vmatpush1.msra.mxu0 0.0
          %1148 = vmatprep.subr.mxu0 0.0
          %1149 = vmatpush1.msra.mxu0 0.0
          %1150 = vmatprep.subr.mxu0 0.0
          %1151 = vmatpush1.msra.mxu0 0.0
          %1152 = vmatprep.subr.mxu0 0.0
          %1153 = vmatpush1.msra.mxu0 0.0
          %1154 = vmatprep.subr.mxu0 0.0
          %1155 = vmatpush1.msra.mxu0 0.0
          %1156 = vmatprep.subr.mxu0 0.0
          %1157 = vmatpush1.msra.mxu0 0.0
          %1158 = vmatprep.subr.mxu0 0.0
          %1159 = vmatpush1.msra.mxu0 0.0
          %1160 = vmatprep.subr.mxu0 0.0
          %1161 = vmatpush1.msra.mxu0 0.0
          %1162 = vmatprep.subr.mxu0 0.0
          %1163 = vmatpush1.msra.mxu0 0.0
          %1164 = vmatprep.subr.mxu0 0.0
          %1165 = vmatpush1.msra.mxu0 0.0
          %1166 = vmatprep.subr.mxu0 0.0
          %1167 = vmatpush1.msra.mxu0 0.0
          %1168 = vmatprep.subr.mxu0 0.0
          %1169 = vmatpush1.msra.mxu0 0.0
          %1170 = vmatprep.subr.mxu0 0.0
          %1171 = vmatpush1.msra.mxu0 0.0
          %1172 = vmatprep.subr.mxu0 0.0
          %1173 = vmatpush1.msra.mxu0 0.0
          %1174 = vmatprep.subr.mxu0 0.0
          %1175 = vmatpush1.msra.mxu0 0.0
          %1176 = vmatprep.subr.mxu0 0.0
          %1177 = vmatpush1.msra.mxu0 0.0
          %1178 = vmatprep.subr.mxu0 0.0
          %1179 = vmatpush1.msra.mxu0 0.0
          %1180 = vmatprep.subr.mxu0 0.0
          %1181 = vmatpush1.msra.mxu0 0.0
          %1182 = vmatprep.subr.mxu0 0.0
          %1183 = vmatpush1.msra.mxu0 0.0
          %1184 = vmatprep.subr.mxu0 0.0
          %1185 = vmatpush1.msra.mxu0 0.0
          %1186 = vmatprep.subr.mxu0 0.0
          %1187 = vmatpush1.msra.mxu0 0.0
          %1188 = vmatprep.subr.mxu0 0.0
          %1189 = vmatpush1.msra.mxu0 0.0
          %1190 = vmatprep.mubr.f32.mxu0 0.0
          %1191 = vmatmul.mubr.f32.gmra.mrb[0].mxu0 %v1115
          %v1192 = vpop.f32.mrb[0].mxu0
          %v1193 = vadd.f32 0.0, %v1192
          %v1194 = vpop.f32.mrb[0].mxu0
          %1195 = vmatprep.mubr.f32.mxu0 0.0
          %1196 = vmatmul.mubr.f32.gmra.mrb[0].mxu0 %v1118
          %v1197 = vpop.f32.mrb[0].mxu0
          %v1198 = vadd.f32 0.0, %v1197
          %v1199 = vpop.f32.mrb[0].mxu0
          %1200 = vmatprep.mubr.f32.mxu0 0.0
          %1201 = vmatmul.mubr.f32.gmra.mrb[0].mxu0 %v1121
          %v1202 = vpop.f32.mrb[0].mxu0
          %v1203 = vadd.f32 0.0, %v1202
          %v1204 = vpop.f32.mrb[0].mxu0
          %1205 = vmatprep.mubr.f32.mxu0 0.0
          %1206 = vmatmul.mubr.f32.gmra.mrb[0].mxu0 %v1124
          %v1207 = vpop.f32.mrb[0].mxu0
          %v1208 = vadd.f32 0.0, %v1207
          %v1209 = vpop.f32.mrb[0].mxu0
          %1210 = vdwg.mxu0
          %vm1211 = vcmask 64512
          %v1213 = vsel %vm1211, %v1193, 0
          %v1216 = vsel %vm1211, %v1198, 0
          %1218 = vmatprep.subr.mxu0 0.0
          %1219 = vmatpush1.msra.mxu0 %v753
          %1220 = vmatprep.subr.mxu0 0.0
          %1221 = vmatpush1.msra.mxu0 0.0
          %1222 = vmatprep.subr.mxu0 0.0
          %1223 = vmatpush1.msra.mxu0 0.0
          %1224 = vmatprep.subr.mxu0 0.0
          %1225 = vmatpush1.msra.mxu0 0.0
          %1226 = vmatprep.subr.mxu0 0.0
          %1227 = vmatpush1.msra.mxu0 0.0
          %1228 = vmatprep.subr.mxu0 0.0
          %1229 = vmatpush1.msra.mxu0 0.0
          %1230 = vmatprep.subr.mxu0 0.0
          %1231 = vmatpush1.msra.mxu0 0.0
          %1232 = vmatprep.subr.mxu0 0.0
          %1233 = vmatpush1.msra.mxu0 0.0
          %1234 = vmatprep.subr.mxu0 0.0
          %1235 = vmatpush1.msra.mxu0 0.0
          %1236 = vmatprep.subr.mxu0 0.0
          %1237 = vmatpush1.msra.mxu0 0.0
          %1238 = vmatprep.subr.mxu0 0.0
          %1239 = vmatpush1.msra.mxu0 0.0
          %1240 = vmatprep.subr.mxu0 0.0
          %1241 = vmatpush1.msra.mxu0 0.0
          %1242 = vmatprep.subr.mxu0 0.0
          %1243 = vmatpush1.msra.mxu0 0.0
          %1244 = vmatprep.subr.mxu0 0.0
          %1245 = vmatpush1.msra.mxu0 0.0
          %1246 = vmatprep.subr.mxu0 0.0
          %1247 = vmatpush1.msra.mxu0 0.0
          %1248 = vmatprep.subr.mxu0 0.0
          %1249 = vmatpush1.msra.mxu0 0.0
          %1250 = vmatprep.subr.mxu0 0.0
          %1251 = vmatpush1.msra.mxu0 0.0
          %1252 = vmatprep.subr.mxu0 0.0
          %1253 = vmatpush1.msra.mxu0 0.0
          %1254 = vmatprep.subr.mxu0 0.0
          %1255 = vmatpush1.msra.mxu0 0.0
          %1256 = vmatprep.subr.mxu0 0.0
          %1257 = vmatpush1.msra.mxu0 0.0
          %1258 = vmatprep.subr.mxu0 0.0
          %1259 = vmatpush1.msra.mxu0 0.0
          %1260 = vmatprep.subr.mxu0 0.0
          %1261 = vmatpush1.msra.mxu0 0.0
          %1262 = vmatprep.subr.mxu0 0.0
          %1263 = vmatpush1.msra.mxu0 0.0
          %1264 = vmatprep.subr.mxu0 0.0
          %1265 = vmatpush1.msra.mxu0 0.0
          %1266 = vmatprep.subr.mxu0 0.0
          %1267 = vmatpush1.msra.mxu0 0.0
          %1268 = vmatprep.subr.mxu0 0.0
          %1269 = vmatpush1.msra.mxu0 0.0
          %1270 = vmatprep.subr.mxu0 0.0
          %1271 = vmatpush1.msra.mxu0 0.0
          %1272 = vmatprep.subr.mxu0 0.0
          %1273 = vmatpush1.msra.mxu0 0.0
          %1274 = vmatprep.subr.mxu0 0.0
          %1275 = vmatpush1.msra.mxu0 0.0
          %1276 = vmatprep.subr.mxu0 0.0
          %1277 = vmatpush1.msra.mxu0 0.0
          %1278 = vmatprep.subr.mxu0 0.0
          %1279 = vmatpush1.msra.mxu0 0.0
          %1280 = vmatprep.subr.mxu0 0.0
          %1281 = vmatpush1.msra.mxu0 0.0
          %1282 = vmatprep.mubr.f32.mxu0 0.0
          %1283 = vmatmul.mubr.f32.gmra.mrb[0].mxu0 %v1213
          %v1284 = vpop.f32.mrb[0].mxu0
          %v1285 = vadd.f32 %v755, %v1284
          %v1286 = vpop.f32.mrb[0].mxu0
          %1287 = vmatprep.mubr.f32.mxu0 0.0
          %1288 = vmatmul.mubr.f32.gmra.mrb[0].mxu0 %v1216
          %v1289 = vpop.f32.mrb[0].mxu0
          %v1290 = vadd.f32 %v756, %v1289
          %v1291 = vpop.f32.mrb[0].mxu0
          %1292 = vdwg.mxu0
          %v1294 = vsel %vm1211, %v1203, 0
          %v1297 = vsel %vm1211, %v1208, 0
          %1299 = vmatprep.subr.mxu0 0.0
          %1300 = vmatpush1.msra.mxu0 %v754
          %1301 = vmatprep.subr.mxu0 0.0
          %1302 = vmatpush1.msra.mxu0 0.0
          %1303 = vmatprep.subr.mxu0 0.0
          %1304 = vmatpush1.msra.mxu0 0.0
          %1305 = vmatprep.subr.mxu0 0.0
          %1306 = vmatpush1.msra.mxu0 0.0
          %1307 = vmatprep.subr.mxu0 0.0
          %1308 = vmatpush1.msra.mxu0 0.0
          %1309 = vmatprep.subr.mxu0 0.0
          %1310 = vmatpush1.msra.mxu0 0.0
          %1311 = vmatprep.subr.mxu0 0.0
          %1312 = vmatpush1.msra.mxu0 0.0
          %1313 = vmatprep.subr.mxu0 0.0
          %1314 = vmatpush1.msra.mxu0 0.0
          %1315 = vmatprep.subr.mxu0 0.0
          %1316 = vmatpush1.msra.mxu0 0.0
          %1317 = vmatprep.subr.mxu0 0.0
          %1318 = vmatpush1.msra.mxu0 0.0
          %1319 = vmatprep.subr.mxu0 0.0
          %1320 = vmatpush1.msra.mxu0 0.0
          %1321 = vmatprep.subr.mxu0 0.0
          %1322 = vmatpush1.msra.mxu0 0.0
          %1323 = vmatprep.subr.mxu0 0.0
          %1324 = vmatpush1.msra.mxu0 0.0
          %1325 = vmatprep.subr.mxu0 0.0
          %1326 = vmatpush1.msra.mxu0 0.0
          %1327 = vmatprep.subr.mxu0 0.0
          %1328 = vmatpush1.msra.mxu0 0.0
          %1329 = vmatprep.subr.mxu0 0.0
          %1330 = vmatpush1.msra.mxu0 0.0
          %1331 = vmatprep.subr.mxu0 0.0
          %1332 = vmatpush1.msra.mxu0 0.0
          %1333 = vmatprep.subr.mxu0 0.0
          %1334 = vmatpush1.msra.mxu0 0.0
          %1335 = vmatprep.subr.mxu0 0.0
          %1336 = vmatpush1.msra.mxu0 0.0
          %1337 = vmatprep.subr.mxu0 0.0
          %1338 = vmatpush1.msra.mxu0 0.0
          %1339 = vmatprep.subr.mxu0 0.0
          %1340 = vmatpush1.msra.mxu0 0.0
          %1341 = vmatprep.subr.mxu0 0.0
          %1342 = vmatpush1.msra.mxu0 0.0
          %1343 = vmatprep.subr.mxu0 0.0
          %1344 = vmatpush1.msra.mxu0 0.0
          %1345 = vmatprep.subr.mxu0 0.0
          %1346 = vmatpush1.msra.mxu0 0.0
          %1347 = vmatprep.subr.mxu0 0.0
          %1348 = vmatpush1.msra.mxu0 0.0
          %1349 = vmatprep.subr.mxu0 0.0
          %1350 = vmatpush1.msra.mxu0 0.0
          %1351 = vmatprep.subr.mxu0 0.0
          %1352 = vmatpush1.msra.mxu0 0.0
          %1353 = vmatprep.subr.mxu0 0.0
          %1354 = vmatpush1.msra.mxu0 0.0
          %1355 = vmatprep.subr.mxu0 0.0
          %1356 = vmatpush1.msra.mxu0 0.0
          %1357 = vmatprep.subr.mxu0 0.0
          %1358 = vmatpush1.msra.mxu0 0.0
          %1359 = vmatprep.subr.mxu0 0.0
          %1360 = vmatpush1.msra.mxu0 0.0
          %1361 = vmatprep.subr.mxu0 0.0
          %1362 = vmatpush1.msra.mxu0 0.0
          %1363 = vmatprep.mubr.f32.mxu0 0.0
          %1364 = vmatmul.mubr.f32.gmra.mrb[0].mxu0 %v1294
          %v1365 = vpop.f32.mrb[0].mxu0
          %v1366 = vadd.f32 %v757, %v1365
          %v1367 = vpop.f32.mrb[0].mxu0
          %1368 = vmatprep.mubr.f32.mxu0 0.0
          %1369 = vmatmul.mubr.f32.gmra.mrb[0].mxu0 %v1297
          %v1370 = vpop.f32.mrb[0].mxu0
          %v1371 = vadd.f32 %v758, %v1370
          %v1372 = vpop.f32.mrb[0].mxu0
          %1373 = vdwg.mxu0
          %v1374 = vsel %vm1113, %v1285, -inf
          %1375 = vmax.xlane.f32.xlu0 %v1374
          %v1376 = vpop.xlane.xlu0 %1375
          %v1377 = vsel %vm1113, %v1290, -inf
          %1378 = vmax.xlane.f32.xlu0 %v1377
          %v1379 = vpop.xlane.xlu0 %1378
          %v1380 = vsub.f32 %v1285, %v1376
          %v1381 = vsub.f32 %v1290, %v1379
          %v1382 = vmul.f32 %v1380, 1.442695
          %v1383 = vpow.pop %v1382
          %v1384 = vmul.f32 %v1381, 1.442695
          %v1385 = vpow.pop %v1384
          %v1386 = vsel %vm1113, %v1383, 0.0
          %1387 = vadd.xlane.f32.xlu0 %v1386
          %v1388 = vpop.xlane.xlu0 %1387
          %v1389 = vsel %vm1113, %v1385, 0.0
          %1390 = vadd.xlane.f32.xlu0 %v1389
          %v1391 = vpop.xlane.xlu0 %1390
          %v1392 = vrcp.pop %v1388
          %v1393 = vmul.f32 %v1383, %v1392
          %v1394 = vrcp.pop %v1391
          %v1395 = vmul.f32 %v1385, %v1394
          %v1396 = vsel %vm1113, %v1366, -inf
          %1397 = vmax.xlane.f32.xlu0 %v1396
          %v1398 = vpop.xlane.xlu0 %1397
          %v1399 = vsel %vm1113, %v1371, -inf
          %1400 = vmax.xlane.f32.xlu0 %v1399
          %v1401 = vpop.xlane.xlu0 %1400
          %v1402 = vsub.f32 %v1366, %v1398
          %v1403 = vsub.f32 %v1371, %v1401
          %v1404 = vmul.f32 %v1402, 1.442695
          %v1405 = vpow.pop %v1404
          %v1406 = vmul.f32 %v1403, 1.442695
          %v1407 = vpow.pop %v1406
          %v1408 = vsel %vm1113, %v1405, 0.0
          %1409 = vadd.xlane.f32.xlu0 %v1408
          %v1410 = vpop.xlane.xlu0 %1409
          %v1411 = vsel %vm1113, %v1407, 0.0
          %1412 = vadd.xlane.f32.xlu0 %v1411
          %v1413 = vpop.xlane.xlu0 %1412
          %v1414 = vrcp.pop %v1410
          %v1415 = vmul.f32 %v1405, %v1414
          %v1416 = vrcp.pop %v1413
          %v1417 = vmul.f32 %v1407, %v1416
          %v1419 = vsel %vm1113, %v1393, 0
          %v1422 = vsel %vm1113, %v1395, 0
          %1424 = vmatprep.subr.mxu0 0.0
          %1425 = vmatpush1.msra.mxu0 %v819
          %1426 = vmatprep.subr.mxu0 0.0
          %1427 = vmatpush1.msra.mxu0 %v820
          %1428 = vmatprep.subr.mxu0 0.0
          %1429 = vmatpush1.msra.mxu0 0.0
          %1430 = vmatprep.subr.mxu0 0.0
          %1431 = vmatpush1.msra.mxu0 0.0
          %1432 = vmatprep.subr.mxu0 0.0
          %1433 = vmatpush1.msra.mxu0 0.0
          %1434 = vmatprep.subr.mxu0 0.0
          %1435 = vmatpush1.msra.mxu0 0.0
          %1436 = vmatprep.subr.mxu0 0.0
          %1437 = vmatpush1.msra.mxu0 0.0
          %1438 = vmatprep.subr.mxu0 0.0
          %1439 = vmatpush1.msra.mxu0 0.0
          %1440 = vmatprep.subr.mxu0 0.0
          %1441 = vmatpush1.msra.mxu0 0.0
          %1442 = vmatprep.subr.mxu0 0.0
          %1443 = vmatpush1.msra.mxu0 0.0
          %1444 = vmatprep.subr.mxu0 0.0
          %1445 = vmatpush1.msra.mxu0 0.0
          %1446 = vmatprep.subr.mxu0 0.0
          %1447 = vmatpush1.msra.mxu0 0.0
          %1448 = vmatprep.subr.mxu0 0.0
          %1449 = vmatpush1.msra.mxu0 0.0
          %1450 = vmatprep.subr.mxu0 0.0
          %1451 = vmatpush1.msra.mxu0 0.0
          %1452 = vmatprep.subr.mxu0 0.0
          %1453 = vmatpush1.msra.mxu0 0.0
          %1454 = vmatprep.subr.mxu0 0.0
          %1455 = vmatpush1.msra.mxu0 0.0
          %1456 = vmatprep.subr.mxu0 0.0
          %1457 = vmatpush1.msra.mxu0 0.0
          %1458 = vmatprep.subr.mxu0 0.0
          %1459 = vmatpush1.msra.mxu0 0.0
          %1460 = vmatprep.subr.mxu0 0.0
          %1461 = vmatpush1.msra.mxu0 0.0
          %1462 = vmatprep.subr.mxu0 0.0
          %1463 = vmatpush1.msra.mxu0 0.0
          %1464 = vmatprep.subr.mxu0 0.0
          %1465 = vmatpush1.msra.mxu0 0.0
          %1466 = vmatprep.subr.mxu0 0.0
          %1467 = vmatpush1.msra.mxu0 0.0
          %1468 = vmatprep.subr.mxu0 0.0
          %1469 = vmatpush1.msra.mxu0 0.0
          %1470 = vmatprep.subr.mxu0 0.0
          %1471 = vmatpush1.msra.mxu0 0.0
          %1472 = vmatprep.subr.mxu0 0.0
          %1473 = vmatpush1.msra.mxu0 0.0
          %1474 = vmatprep.subr.mxu0 0.0
          %1475 = vmatpush1.msra.mxu0 0.0
          %1476 = vmatprep.subr.mxu0 0.0
          %1477 = vmatpush1.msra.mxu0 0.0
          %1478 = vmatprep.subr.mxu0 0.0
          %1479 = vmatpush1.msra.mxu0 0.0
          %1480 = vmatprep.subr.mxu0 0.0
          %1481 = vmatpush1.msra.mxu0 0.0
          %1482 = vmatprep.subr.mxu0 0.0
          %1483 = vmatpush1.msra.mxu0 0.0
          %1484 = vmatprep.subr.mxu0 0.0
          %1485 = vmatpush1.msra.mxu0 0.0
          %1486 = vmatprep.subr.mxu0 0.0
          %1487 = vmatpush1.msra.mxu0 0.0
          %1488 = vmatprep.mubr.f32.mxu0 0.0
          %1489 = vmatmul.mubr.f32.gmra.mrb[0].mxu0 %v1419
          %v1490 = vpop.f32.mrb[0].mxu0
          %v1491 = vadd.f32 0.0, %v1490
          %v1492 = vpop.f32.mrb[0].mxu0
          %1493 = vmatprep.mubr.f32.mxu0 0.0
          %1494 = vmatmul.mubr.f32.gmra.mrb[0].mxu0 %v1422
          %v1495 = vpop.f32.mrb[0].mxu0
          %v1496 = vadd.f32 0.0, %v1495
          %v1497 = vpop.f32.mrb[0].mxu0
          %1498 = vdwg.mxu0
          %v1500 = vsel %vm1113, %v1415, 0
          %v1503 = vsel %vm1113, %v1417, 0
          %1505 = vmatprep.subr.mxu0 0.0
          %1506 = vmatpush1.msra.mxu0 %v819
          %1507 = vmatprep.subr.mxu0 0.0
          %1508 = vmatpush1.msra.mxu0 %v820
          %1509 = vmatprep.subr.mxu0 0.0
          %1510 = vmatpush1.msra.mxu0 0.0
          %1511 = vmatprep.subr.mxu0 0.0
          %1512 = vmatpush1.msra.mxu0 0.0
          %1513 = vmatprep.subr.mxu0 0.0
          %1514 = vmatpush1.msra.mxu0 0.0
          %1515 = vmatprep.subr.mxu0 0.0
          %1516 = vmatpush1.msra.mxu0 0.0
          %1517 = vmatprep.subr.mxu0 0.0
          %1518 = vmatpush1.msra.mxu0 0.0
          %1519 = vmatprep.subr.mxu0 0.0
          %1520 = vmatpush1.msra.mxu0 0.0
          %1521 = vmatprep.subr.mxu0 0.0
          %1522 = vmatpush1.msra.mxu0 0.0
          %1523 = vmatprep.subr.mxu0 0.0
          %1524 = vmatpush1.msra.mxu0 0.0
          %1525 = vmatprep.subr.mxu0 0.0
          %1526 = vmatpush1.msra.mxu0 0.0
          %1527 = vmatprep.subr.mxu0 0.0
          %1528 = vmatpush1.msra.mxu0 0.0
          %1529 = vmatprep.subr.mxu0 0.0
          %1530 = vmatpush1.msra.mxu0 0.0
          %1531 = vmatprep.subr.mxu0 0.0
          %1532 = vmatpush1.msra.mxu0 0.0
          %1533 = vmatprep.subr.mxu0 0.0
          %1534 = vmatpush1.msra.mxu0 0.0
          %1535 = vmatprep.subr.mxu0 0.0
          %1536 = vmatpush1.msra.mxu0 0.0
          %1537 = vmatprep.subr.mxu0 0.0
          %1538 = vmatpush1.msra.mxu0 0.0
          %1539 = vmatprep.subr.mxu0 0.0
          %1540 = vmatpush1.msra.mxu0 0.0
          %1541 = vmatprep.subr.mxu0 0.0
          %1542 = vmatpush1.msra.mxu0 0.0
          %1543 = vmatprep.subr.mxu0 0.0
          %1544 = vmatpush1.msra.mxu0 0.0
          %1545 = vmatprep.subr.mxu0 0.0
          %1546 = vmatpush1.msra.mxu0 0.0
          %1547 = vmatprep.subr.mxu0 0.0
          %1548 = vmatpush1.msra.mxu0 0.0
          %1549 = vmatprep.subr.mxu0 0.0
          %1550 = vmatpush1.msra.mxu0 0.0
          %1551 = vmatprep.subr.mxu0 0.0
          %1552 = vmatpush1.msra.mxu0 0.0
          %1553 = vmatprep.subr.mxu0 0.0
          %1554 = vmatpush1.msra.mxu0 0.0
          %1555 = vmatprep.subr.mxu0 0.0
          %1556 = vmatpush1.msra.mxu0 0.0
          %1557 = vmatprep.subr.mxu0 0.0
          %1558 = vmatpush1.msra.mxu0 0.0
          %1559 = vmatprep.subr.mxu0 0.0
          %1560 = vmatpush1.msra.mxu0 0.0
          %1561 = vmatprep.subr.mxu0 0.0
          %1562 = vmatpush1.msra.mxu0 0.0
          %1563 = vmatprep.subr.mxu0 0.0
          %1564 = vmatpush1.msra.mxu0 0.0
          %1565 = vmatprep.subr.mxu0 0.0
          %1566 = vmatpush1.msra.mxu0 0.0
          %1567 = vmatprep.subr.mxu0 0.0
          %1568 = vmatpush1.msra.mxu0 0.0
          %1569 = vmatprep.mubr.f32.mxu0 0.0
          %1570 = vmatmul.mubr.f32.gmra.mrb[0].mxu0 %v1500
          %v1571 = vpop.f32.mrb[0].mxu0
          %v1572 = vadd.f32 0.0, %v1571
          %v1573 = vpop.f32.mrb[0].mxu0
          %1574 = vmatprep.mubr.f32.mxu0 0.0
          %1575 = vmatmul.mubr.f32.gmra.mrb[0].mxu0 %v1503
          %v1576 = vpop.f32.mrb[0].mxu0
          %v1577 = vadd.f32 0.0, %v1576
          %v1578 = vpop.f32.mrb[0].mxu0
          %1579 = vdwg.mxu0
          %v1580 = vlaneseq
          %v1581 = vand.u32 %v1580, 127
          %vm1582 = vcmp.eq.s32.totalorder %v1581, 0
          %v1583 = vsel %vm1582, %v1491, %v1572
          %v1584 = vsel %vm1582, %v1496, %v1577
          %v1585 = vadd.f32 %v1583, %v1103
          %v1586 = vadd.f32 %v1584, %v1104
          %1589 = vrot.lane.b32.xlu0 %v1005, 124
          %v1590 = vpop.permute.xlu0 %1589
          %1591 = vrot.lane.b32.xlu0 %v1006, 124
          %v1592 = vpop.permute.xlu0 %1591
          %v1596 = vsel %vm1113, %v759, 0
          %v1599 = vsel %vm1113, %v760, 0
          %1601 = vmatprep.subr.mxu0 0.0
          %1602 = vmatpush1.msra.mxu0 %v1590
          %1603 = vmatprep.subr.mxu0 0.0
          %1604 = vmatpush1.msra.mxu0 %v1592
          %1605 = vmatprep.subr.mxu0 0.0
          %1606 = vmatpush1.msra.mxu0 0.0
          %1607 = vmatprep.subr.mxu0 0.0
          %1608 = vmatpush1.msra.mxu0 0.0
          %1609 = vmatprep.subr.mxu0 0.0
          %1610 = vmatpush1.msra.mxu0 0.0
          %1611 = vmatprep.subr.mxu0 0.0
          %1612 = vmatpush1.msra.mxu0 0.0
          %1613 = vmatprep.subr.mxu0 0.0
          %1614 = vmatpush1.msra.mxu0 0.0
          %1615 = vmatprep.subr.mxu0 0.0
          %1616 = vmatpush1.msra.mxu0 0.0
          %1617 = vmatprep.subr.mxu0 0.0
          %1618 = vmatpush1.msra.mxu0 0.0
          %1619 = vmatprep.subr.mxu0 0.0
          %1620 = vmatpush1.msra.mxu0 0.0
          %1621 = vmatprep.subr.mxu0 0.0
          %1622 = vmatpush1.msra.mxu0 0.0
          %1623 = vmatprep.subr.mxu0 0.0
          %1624 = vmatpush1.msra.mxu0 0.0
          %1625 = vmatprep.subr.mxu0 0.0
          %1626 = vmatpush1.msra.mxu0 0.0
          %1627 = vmatprep.subr.mxu0 0.0
          %1628 = vmatpush1.msra.mxu0 0.0
          %1629 = vmatprep.subr.mxu0 0.0
          %1630 = vmatpush1.msra.mxu0 0.0
          %1631 = vmatprep.subr.mxu0 0.0
          %1632 = vmatpush1.msra.mxu0 0.0
          %1633 = vmatprep.subr.mxu0 0.0
          %1634 = vmatpush1.msra.mxu0 0.0
          %1635 = vmatprep.subr.mxu0 0.0
          %1636 = vmatpush1.msra.mxu0 0.0
          %1637 = vmatprep.subr.mxu0 0.0
          %1638 = vmatpush1.msra.mxu0 0.0
          %1639 = vmatprep.subr.mxu0 0.0
          %1640 = vmatpush1.msra.mxu0 0.0
          %1641 = vmatprep.subr.mxu0 0.0
          %1642 = vmatpush1.msra.mxu0 0.0
          %1643 = vmatprep.subr.mxu0 0.0
          %1644 = vmatpush1.msra.mxu0 0.0
          %1645 = vmatprep.subr.mxu0 0.0
          %1646 = vmatpush1.msra.mxu0 0.0
          %1647 = vmatprep.subr.mxu0 0.0
          %1648 = vmatpush1.msra.mxu0 0.0
          %1649 = vmatprep.subr.mxu0 0.0
          %1650 = vmatpush1.msra.mxu0 0.0
          %1651 = vmatprep.subr.mxu0 0.0
          %1652 = vmatpush1.msra.mxu0 0.0
          %1653 = vmatprep.subr.mxu0 0.0
          %1654 = vmatpush1.msra.mxu0 0.0
          %1655 = vmatprep.subr.mxu0 0.0
          %1656 = vmatpush1.msra.mxu0 0.0
          %1657 = vmatprep.subr.mxu0 0.0
          %1658 = vmatpush1.msra.mxu0 0.0
          %1659 = vmatprep.subr.mxu0 0.0
          %1660 = vmatpush1.msra.mxu0 0.0
          %1661 = vmatprep.subr.mxu0 0.0
          %1662 = vmatpush1.msra.mxu0 0.0
          %1663 = vmatprep.subr.mxu0 0.0
          %1664 = vmatpush1.msra.mxu0 0.0
          %1665 = vmatprep.mubr.f32.mxu0 0.0
          %1666 = vmatmul.mubr.f32.gmra.mrb[0].mxu0 %v1596
          %v1667 = vpop.f32.mrb[0].mxu0
          %v1668 = vadd.f32 %v786, %v1667
          %v1669 = vpop.f32.mrb[0].mxu0
          %1670 = vmatprep.mubr.f32.mxu0 0.0
          %1671 = vmatmul.mubr.f32.gmra.mrb[0].mxu0 %v1599
          %v1672 = vpop.f32.mrb[0].mxu0
          %v1673 = vadd.f32 %v786, %v1672
          %v1674 = vpop.f32.mrb[0].mxu0
          %1675 = vdwg.mxu0
          %v1676 = vxor.u32 %v1668, 2147483648
          %v1677 = vxor.u32 %v1673, 2147483648
          %v1678 = vmul.f32 %v1676, 1.442695
          %v1679 = vpow.pop %v1678
          %v1680 = vmul.f32 %v1677, 1.442695
          %v1681 = vpow.pop %v1680
          %v1682 = vadd.f32 %v1679, 1.0
          %v1683 = vadd.f32 %v1681, 1.0
          %v1684 = vrcp.pop %v1682
          %v1685 = vmul.f32 1.0, %v1684
          %v1686 = vrcp.pop %v1683
          %v1687 = vmul.f32 1.0, %v1686
          %1688 = vrot.lane.b32.xlu0 %v1005, 120
          %v1689 = vpop.permute.xlu0 %1688
          %1690 = vrot.lane.b32.xlu0 %v1006, 120
          %v1691 = vpop.permute.xlu0 %1690
          %v1695 = vsel %vm1113, %v761, 0
          %v1698 = vsel %vm1113, %v762, 0
          %1700 = vmatprep.subr.mxu0 0.0
          %1701 = vmatpush1.msra.mxu0 %v1689
          %1702 = vmatprep.subr.mxu0 0.0
          %1703 = vmatpush1.msra.mxu0 %v1691
          %1704 = vmatprep.subr.mxu0 0.0
          %1705 = vmatpush1.msra.mxu0 0.0
          %1706 = vmatprep.subr.mxu0 0.0
          %1707 = vmatpush1.msra.mxu0 0.0
          %1708 = vmatprep.subr.mxu0 0.0
          %1709 = vmatpush1.msra.mxu0 0.0
          %1710 = vmatprep.subr.mxu0 0.0
          %1711 = vmatpush1.msra.mxu0 0.0
          %1712 = vmatprep.subr.mxu0 0.0
          %1713 = vmatpush1.msra.mxu0 0.0
          %1714 = vmatprep.subr.mxu0 0.0
          %1715 = vmatpush1.msra.mxu0 0.0
          %1716 = vmatprep.subr.mxu0 0.0
          %1717 = vmatpush1.msra.mxu0 0.0
          %1718 = vmatprep.subr.mxu0 0.0
          %1719 = vmatpush1.msra.mxu0 0.0
          %1720 = vmatprep.subr.mxu0 0.0
          %1721 = vmatpush1.msra.mxu0 0.0
          %1722 = vmatprep.subr.mxu0 0.0
          %1723 = vmatpush1.msra.mxu0 0.0
          %1724 = vmatprep.subr.mxu0 0.0
          %1725 = vmatpush1.msra.mxu0 0.0
          %1726 = vmatprep.subr.mxu0 0.0
          %1727 = vmatpush1.msra.mxu0 0.0
          %1728 = vmatprep.subr.mxu0 0.0
          %1729 = vmatpush1.msra.mxu0 0.0
          %1730 = vmatprep.subr.mxu0 0.0
          %1731 = vmatpush1.msra.mxu0 0.0
          %1732 = vmatprep.subr.mxu0 0.0
          %1733 = vmatpush1.msra.mxu0 0.0
          %1734 = vmatprep.subr.mxu0 0.0
          %1735 = vmatpush1.msra.mxu0 0.0
          %1736 = vmatprep.subr.mxu0 0.0
          %1737 = vmatpush1.msra.mxu0 0.0
          %1738 = vmatprep.subr.mxu0 0.0
          %1739 = vmatpush1.msra.mxu0 0.0
          %1740 = vmatprep.subr.mxu0 0.0
          %1741 = vmatpush1.msra.mxu0 0.0
          %1742 = vmatprep.subr.mxu0 0.0
          %1743 = vmatpush1.msra.mxu0 0.0
          %1744 = vmatprep.subr.mxu0 0.0
          %1745 = vmatpush1.msra.mxu0 0.0
          %1746 = vmatprep.subr.mxu0 0.0
          %1747 = vmatpush1.msra.mxu0 0.0
          %1748 = vmatprep.subr.mxu0 0.0
          %1749 = vmatpush1.msra.mxu0 0.0
          %1750 = vmatprep.subr.mxu0 0.0
          %1751 = vmatpush1.msra.mxu0 0.0
          %1752 = vmatprep.subr.mxu0 0.0
          %1753 = vmatpush1.msra.mxu0 0.0
          %1754 = vmatprep.subr.mxu0 0.0
          %1755 = vmatpush1.msra.mxu0 0.0
          %1756 = vmatprep.subr.mxu0 0.0
          %1757 = vmatpush1.msra.mxu0 0.0
          %1758 = vmatprep.subr.mxu0 0.0
          %1759 = vmatpush1.msra.mxu0 0.0
          %1760 = vmatprep.subr.mxu0 0.0
          %1761 = vmatpush1.msra.mxu0 0.0
          %1762 = vmatprep.subr.mxu0 0.0
          %1763 = vmatpush1.msra.mxu0 0.0
          %1764 = vmatprep.mubr.f32.mxu0 0.0
          %1765 = vmatmul.mubr.f32.gmra.mrb[0].mxu0 %v1695
          %v1766 = vpop.f32.mrb[0].mxu0
          %v1767 = vadd.f32 %v793, %v1766
          %v1768 = vpop.f32.mrb[0].mxu0
          %1769 = vmatprep.mubr.f32.mxu0 0.0
          %1770 = vmatmul.mubr.f32.gmra.mrb[0].mxu0 %v1698
          %v1771 = vpop.f32.mrb[0].mxu0
          %v1772 = vadd.f32 %v793, %v1771
          %v1773 = vpop.f32.mrb[0].mxu0
          %1774 = vdwg.mxu0
          %v1775 = vxor.u32 %v1767, 2147483648
          %v1776 = vxor.u32 %v1772, 2147483648
          %v1777 = vmul.f32 %v1775, 1.442695
          %v1778 = vpow.pop %v1777
          %v1779 = vmul.f32 %v1776, 1.442695
          %v1780 = vpow.pop %v1779
          %v1781 = vadd.f32 %v1778, 1.0
          %v1782 = vadd.f32 %v1780, 1.0
          %v1783 = vrcp.pop %v1781
          %v1784 = vmul.f32 1.0, %v1783
          %v1785 = vrcp.pop %v1782
          %v1786 = vmul.f32 1.0, %v1785
          %v1787 = vmul.f32 %v1685, %v821
          %v1788 = vmul.f32 %v1687, %v822
          %v1790 = vsel %vm911, %v1787, 0
          %v1793 = vsel %vm911, %v1788, 0
          %v1796 = vsel %vm918, %v765, 0
          %1798 = vmatprep.subr.mxu0 0.0
          %1799 = vmatpush1.msra.mxu0 %v1796
          %1800 = vmatprep.subr.mxu0 0.0
          %1801 = vmatpush1.msra.mxu0 0.0
          %1802 = vmatprep.subr.mxu0 0.0
          %1803 = vmatpush1.msra.mxu0 0.0
          %1804 = vmatprep.subr.mxu0 0.0
          %1805 = vmatpush1.msra.mxu0 0.0
          %1806 = vmatprep.subr.mxu0 0.0
          %1807 = vmatpush1.msra.mxu0 0.0
          %1808 = vmatprep.subr.mxu0 0.0
          %1809 = vmatpush1.msra.mxu0 0.0
          %1810 = vmatprep.subr.mxu0 0.0
          %1811 = vmatpush1.msra.mxu0 0.0
          %1812 = vmatprep.subr.mxu0 0.0
          %1813 = vmatpush1.msra.mxu0 0.0
          %1814 = vmatprep.subr.mxu0 0.0
          %1815 = vmatpush1.msra.mxu0 0.0
          %1816 = vmatprep.subr.mxu0 0.0
          %1817 = vmatpush1.msra.mxu0 0.0
          %1818 = vmatprep.subr.mxu0 0.0
          %1819 = vmatpush1.msra.mxu0 0.0
          %1820 = vmatprep.subr.mxu0 0.0
          %1821 = vmatpush1.msra.mxu0 0.0
          %1822 = vmatprep.subr.mxu0 0.0
          %1823 = vmatpush1.msra.mxu0 0.0
          %1824 = vmatprep.subr.mxu0 0.0
          %1825 = vmatpush1.msra.mxu0 0.0
          %1826 = vmatprep.subr.mxu0 0.0
          %1827 = vmatpush1.msra.mxu0 0.0
          %1828 = vmatprep.subr.mxu0 0.0
          %1829 = vmatpush1.msra.mxu0 0.0
          %1830 = vmatprep.subr.mxu0 0.0
          %1831 = vmatpush1.msra.mxu0 0.0
          %1832 = vmatprep.subr.mxu0 0.0
          %1833 = vmatpush1.msra.mxu0 0.0
          %1834 = vmatprep.subr.mxu0 0.0
          %1835 = vmatpush1.msra.mxu0 0.0
          %1836 = vmatprep.subr.mxu0 0.0
          %1837 = vmatpush1.msra.mxu0 0.0
          %1838 = vmatprep.subr.mxu0 0.0
          %1839 = vmatpush1.msra.mxu0 0.0
          %1840 = vmatprep.subr.mxu0 0.0
          %1841 = vmatpush1.msra.mxu0 0.0
          %1842 = vmatprep.subr.mxu0 0.0
          %1843 = vmatpush1.msra.mxu0 0.0
          %1844 = vmatprep.subr.mxu0 0.0
          %1845 = vmatpush1.msra.mxu0 0.0
          %1846 = vmatprep.subr.mxu0 0.0
          %1847 = vmatpush1.msra.mxu0 0.0
          %1848 = vmatprep.subr.mxu0 0.0
          %1849 = vmatpush1.msra.mxu0 0.0
          %1850 = vmatprep.subr.mxu0 0.0
          %1851 = vmatpush1.msra.mxu0 0.0
          %1852 = vmatprep.subr.mxu0 0.0
          %1853 = vmatpush1.msra.mxu0 0.0
          %1854 = vmatprep.subr.mxu0 0.0
          %1855 = vmatpush1.msra.mxu0 0.0
          %1856 = vmatprep.subr.mxu0 0.0
          %1857 = vmatpush1.msra.mxu0 0.0
          %1858 = vmatprep.subr.mxu0 0.0
          %1859 = vmatpush1.msra.mxu0 0.0
          %1860 = vmatprep.subr.mxu0 0.0
          %1861 = vmatpush1.msra.mxu0 0.0
          %1862 = vmatprep.mubr.f32.mxu0 0.0
          %1863 = vmatmul.mubr.f32.gmra.mrb[0].mxu0 %v1790
          %v1864 = vpop.f32.mrb[0].mxu0
          %v1865 = vadd.f32 0.0, %v1864
          %v1866 = vpop.f32.mrb[0].mxu0
          %1867 = vmatprep.mubr.f32.mxu0 0.0
          %1868 = vmatmul.mubr.f32.gmra.mrb[0].mxu0 %v1793
          %v1869 = vpop.f32.mrb[0].mxu0
          %v1870 = vadd.f32 0.0, %v1869
          %v1871 = vpop.f32.mrb[0].mxu0
          %1872 = vdwg.mxu0
          %1875 = vrot.lane.b32.xlu0 %v1865, 2
          %v1876 = vpop.permute.xlu0 %1875
          %1877 = vrot.lane.b32.xlu0 %v1870, 2
          %v1878 = vpop.permute.xlu0 %1877
          %v1881 = vadd.f32 %v1083, %v1876
          %v1882 = vadd.f32 %v1088, %v1878
          %1885 = vrot.lane.b32.xlu0 %v1881, 126
          %v1886 = vpop.permute.xlu0 %1885
          %1887 = vrot.lane.b32.xlu0 %v1882, 126
          %v1888 = vpop.permute.xlu0 %1887
          %v1892 = vsel %vm1113, %v763, 0
          %v1895 = vsel %vm1113, %v764, 0
          %1897 = vmatprep.subr.mxu0 0.0
          %1898 = vmatpush1.msra.mxu0 %v1886
          %1899 = vmatprep.subr.mxu0 0.0
          %1900 = vmatpush1.msra.mxu0 %v1888
          %1901 = vmatprep.subr.mxu0 0.0
          %1902 = vmatpush1.msra.mxu0 0.0
          %1903 = vmatprep.subr.mxu0 0.0
          %1904 = vmatpush1.msra.mxu0 0.0
          %1905 = vmatprep.subr.mxu0 0.0
          %1906 = vmatpush1.msra.mxu0 0.0
          %1907 = vmatprep.subr.mxu0 0.0
          %1908 = vmatpush1.msra.mxu0 0.0
          %1909 = vmatprep.subr.mxu0 0.0
          %1910 = vmatpush1.msra.mxu0 0.0
          %1911 = vmatprep.subr.mxu0 0.0
          %1912 = vmatpush1.msra.mxu0 0.0
          %1913 = vmatprep.subr.mxu0 0.0
          %1914 = vmatpush1.msra.mxu0 0.0
          %1915 = vmatprep.subr.mxu0 0.0
          %1916 = vmatpush1.msra.mxu0 0.0
          %1917 = vmatprep.subr.mxu0 0.0
          %1918 = vmatpush1.msra.mxu0 0.0
          %1919 = vmatprep.subr.mxu0 0.0
          %1920 = vmatpush1.msra.mxu0 0.0
          %1921 = vmatprep.subr.mxu0 0.0
          %1922 = vmatpush1.msra.mxu0 0.0
          %1923 = vmatprep.subr.mxu0 0.0
          %1924 = vmatpush1.msra.mxu0 0.0
          %1925 = vmatprep.subr.mxu0 0.0
          %1926 = vmatpush1.msra.mxu0 0.0
          %1927 = vmatprep.subr.mxu0 0.0
          %1928 = vmatpush1.msra.mxu0 0.0
          %1929 = vmatprep.subr.mxu0 0.0
          %1930 = vmatpush1.msra.mxu0 0.0
          %1931 = vmatprep.subr.mxu0 0.0
          %1932 = vmatpush1.msra.mxu0 0.0
          %1933 = vmatprep.subr.mxu0 0.0
          %1934 = vmatpush1.msra.mxu0 0.0
          %1935 = vmatprep.subr.mxu0 0.0
          %1936 = vmatpush1.msra.mxu0 0.0
          %1937 = vmatprep.subr.mxu0 0.0
          %1938 = vmatpush1.msra.mxu0 0.0
          %1939 = vmatprep.subr.mxu0 0.0
          %1940 = vmatpush1.msra.mxu0 0.0
          %1941 = vmatprep.subr.mxu0 0.0
          %1942 = vmatpush1.msra.mxu0 0.0
          %1943 = vmatprep.subr.mxu0 0.0
          %1944 = vmatpush1.msra.mxu0 0.0
          %1945 = vmatprep.subr.mxu0 0.0
          %1946 = vmatpush1.msra.mxu0 0.0
          %1947 = vmatprep.subr.mxu0 0.0
          %1948 = vmatpush1.msra.mxu0 0.0
          %1949 = vmatprep.subr.mxu0 0.0
          %1950 = vmatpush1.msra.mxu0 0.0
          %1951 = vmatprep.subr.mxu0 0.0
          %1952 = vmatpush1.msra.mxu0 0.0
          %1953 = vmatprep.subr.mxu0 0.0
          %1954 = vmatpush1.msra.mxu0 0.0
          %1955 = vmatprep.subr.mxu0 0.0
          %1956 = vmatpush1.msra.mxu0 0.0
          %1957 = vmatprep.subr.mxu0 0.0
          %1958 = vmatpush1.msra.mxu0 0.0
          %1959 = vmatprep.subr.mxu0 0.0
          %1960 = vmatpush1.msra.mxu0 0.0
          %1961 = vmatprep.mubr.f32.mxu0 0.0
          %1962 = vmatmul.mubr.f32.gmra.mrb[0].mxu0 %v1892
          %v1963 = vpop.f32.mrb[0].mxu0
          %v1964 = vadd.f32 %v800, %v1963
          %v1965 = vpop.f32.mrb[0].mxu0
          %1966 = vmatprep.mubr.f32.mxu0 0.0
          %1967 = vmatmul.mubr.f32.gmra.mrb[0].mxu0 %v1895
          %v1968 = vpop.f32.mrb[0].mxu0
          %v1969 = vadd.f32 %v800, %v1968
          %v1970 = vpop.f32.mrb[0].mxu0
          %1971 = vdwg.mxu0
          %v1972 = vtanh.pop %v1964
          %v1973 = vtanh.pop %v1969
          %v1974 = vmul.f32 %v1784, %v821
          %v1975 = vmul.f32 %v1786, %v822
          %v1976 = vsub.f32 1.0, %v1784
          %v1977 = vsub.f32 1.0, %v1786
          %v1978 = vmul.f32 %v1976, %v1972
          %v1979 = vmul.f32 %v1977, %v1973
          %v1980 = vadd.f32 %v1974, %v1978
          %v1981 = vadd.f32 %v1975, %v1979
          %v1983 = vsel %vm911, %v1980, 0
          %v1986 = vsel %vm911, %v1981, 0
          %v1989 = vsel %vm918, %v766, 0
          %1991 = vmatprep.subr.mxu0 0.0
          %1992 = vmatpush1.msra.mxu0 %v1989
          %1993 = vmatprep.subr.mxu0 0.0
          %1994 = vmatpush1.msra.mxu0 0.0
          %1995 = vmatprep.subr.mxu0 0.0
          %1996 = vmatpush1.msra.mxu0 0.0
          %1997 = vmatprep.subr.mxu0 0.0
          %1998 = vmatpush1.msra.mxu0 0.0
          %1999 = vmatprep.subr.mxu0 0.0
          %2000 = vmatpush1.msra.mxu0 0.0
          %2001 = vmatprep.subr.mxu0 0.0
          %2002 = vmatpush1.msra.mxu0 0.0
          %2003 = vmatprep.subr.mxu0 0.0
          %2004 = vmatpush1.msra.mxu0 0.0
          %2005 = vmatprep.subr.mxu0 0.0
          %2006 = vmatpush1.msra.mxu0 0.0
          %2007 = vmatprep.subr.mxu0 0.0
          %2008 = vmatpush1.msra.mxu0 0.0
          %2009 = vmatprep.subr.mxu0 0.0
          %2010 = vmatpush1.msra.mxu0 0.0
          %2011 = vmatprep.subr.mxu0 0.0
          %2012 = vmatpush1.msra.mxu0 0.0
          %2013 = vmatprep.subr.mxu0 0.0
          %2014 = vmatpush1.msra.mxu0 0.0
          %2015 = vmatprep.subr.mxu0 0.0
          %2016 = vmatpush1.msra.mxu0 0.0
          %2017 = vmatprep.subr.mxu0 0.0
          %2018 = vmatpush1.msra.mxu0 0.0
          %2019 = vmatprep.subr.mxu0 0.0
          %2020 = vmatpush1.msra.mxu0 0.0
          %2021 = vmatprep.subr.mxu0 0.0
          %2022 = vmatpush1.msra.mxu0 0.0
          %2023 = vmatprep.subr.mxu0 0.0
          %2024 = vmatpush1.msra.mxu0 0.0
          %2025 = vmatprep.subr.mxu0 0.0
          %2026 = vmatpush1.msra.mxu0 0.0
          %2027 = vmatprep.subr.mxu0 0.0
          %2028 = vmatpush1.msra.mxu0 0.0
          %2029 = vmatprep.subr.mxu0 0.0
          %2030 = vmatpush1.msra.mxu0 0.0
          %2031 = vmatprep.subr.mxu0 0.0
          %2032 = vmatpush1.msra.mxu0 0.0
          %2033 = vmatprep.subr.mxu0 0.0
          %2034 = vmatpush1.msra.mxu0 0.0
          %2035 = vmatprep.subr.mxu0 0.0
          %2036 = vmatpush1.msra.mxu0 0.0
          %2037 = vmatprep.subr.mxu0 0.0
          %2038 = vmatpush1.msra.mxu0 0.0
          %2039 = vmatprep.subr.mxu0 0.0
          %2040 = vmatpush1.msra.mxu0 0.0
          %2041 = vmatprep.subr.mxu0 0.0
          %2042 = vmatpush1.msra.mxu0 0.0
          %2043 = vmatprep.subr.mxu0 0.0
          %2044 = vmatpush1.msra.mxu0 0.0
          %2045 = vmatprep.subr.mxu0 0.0
          %2046 = vmatpush1.msra.mxu0 0.0
          %2047 = vmatprep.subr.mxu0 0.0
          %2048 = vmatpush1.msra.mxu0 0.0
          %2049 = vmatprep.subr.mxu0 0.0
          %2050 = vmatpush1.msra.mxu0 0.0
          %2051 = vmatprep.subr.mxu0 0.0
          %2052 = vmatpush1.msra.mxu0 0.0
          %2053 = vmatprep.subr.mxu0 0.0
          %2054 = vmatpush1.msra.mxu0 0.0
          %2055 = vmatprep.mubr.f32.mxu0 0.0
          %2056 = vmatmul.mubr.f32.gmra.mrb[0].mxu0 %v1983
          %v2057 = vpop.f32.mrb[0].mxu0
          %v2058 = vadd.f32 %v807, %v2057
          %v2059 = vpop.f32.mrb[0].mxu0
          %2060 = vmatprep.mubr.f32.mxu0 0.0
          %2061 = vmatmul.mubr.f32.gmra.mrb[0].mxu0 %v1986
          %v2062 = vpop.f32.mrb[0].mxu0
          %v2063 = vadd.f32 %v807, %v2062
          %v2064 = vpop.f32.mrb[0].mxu0
          %2065 = vdwg.mxu0
          %v2066 = vxor.u32 %v2058, 2147483648
          %v2067 = vxor.u32 %v2063, 2147483648
          %v2068 = vmul.f32 %v2066, 1.442695
          %v2069 = vpow.pop %v2068
          %v2070 = vmul.f32 %v2067, 1.442695
          %v2071 = vpow.pop %v2070
          %v2072 = vadd.f32 %v2069, 1.0
          %v2073 = vadd.f32 %v2071, 1.0
          %v2074 = vrcp.pop %v2072
          %v2075 = vmul.f32 1.0, %v2074
          %v2076 = vrcp.pop %v2073
          %v2077 = vmul.f32 1.0, %v2076
          %v2078 = vmax.f32 %v2058, 0.0
          %v2079 = vmax.f32 %v2063, 0.0
          %v2080 = vand.u32 2147483647, %v2058
          %v2081 = vand.u32 2147483647, %v2063
          %v2082 = vsub.f32 0.0, %v2080
          %v2083 = vsub.f32 0.0, %v2081
          %v2084 = vmul.f32 %v2082, 1.442695
          %v2085 = vpow.pop %v2084
          %v2086 = vmul.f32 %v2083, 1.442695
          %v2087 = vpow.pop %v2086
          %v2088 = vadd.f32 %v2085, 1.0
          %v2089 = vadd.f32 %v2087, 1.0
          %v2090 = vlog2.pop %v2088
          %v2091 = vmul.f32 %v2090, 0.6931472
          %v2092 = vlog2.pop %v2089
          %v2093 = vmul.f32 %v2092, 0.6931472
          %v2094 = vadd.f32 %v2078, %v2091
          %v2095 = vadd.f32 %v2079, %v2093
          %v2096 = vadd.f32 %v2094, 2.0
          %v2097 = vadd.f32 %v2095, 2.0
          %v2098 = vadd.f32 %v2058, 2.0
          %v2099 = vadd.f32 %v2063, 2.0
          %v2100 = vmax.f32 %v2098, 0.0
          %v2101 = vmax.f32 %v2099, 0.0
          %v2102 = vand.u32 2147483647, %v2098
          %v2103 = vand.u32 2147483647, %v2099
          %v2104 = vsub.f32 0.0, %v2102
          %v2105 = vsub.f32 0.0, %v2103
          %v2106 = vmul.f32 %v2104, 1.442695
          %v2107 = vpow.pop %v2106
          %v2108 = vmul.f32 %v2105, 1.442695
          %v2109 = vpow.pop %v2108
          %v2110 = vadd.f32 %v2107, 1.0
          %v2111 = vadd.f32 %v2109, 1.0
          %v2112 = vlog2.pop %v2110
          %v2113 = vmul.f32 %v2112, 0.6931472
          %v2114 = vlog2.pop %v2111
          %v2115 = vmul.f32 %v2114, 0.6931472
          %v2116 = vadd.f32 %v2100, %v2113
          %v2117 = vadd.f32 %v2101, %v2115
          %v2118 = vadd.f32 %v2116, 1.0
          %v2119 = vadd.f32 %v2117, 1.0
          %2122 = vrot.lane.b32.xlu0 %v2118, 127
          %v2123 = vpop.permute.xlu0 %2122
          %2124 = vrot.lane.b32.xlu0 %v2119, 127
          %v2125 = vpop.permute.xlu0 %2124
          %v2128 = vmul.f32 %v2094, %v2123
          %v2129 = vmul.f32 %v2095, %v2125
          %v2130 = vsub.f32 %v2096, 1.0
          %v2131 = vsub.f32 %v2097, 1.0
          %2134 = vrot.lane.b32.xlu0 %v2130, 2
          %v2135 = vpop.permute.xlu0 %2134
          %2136 = vrot.lane.b32.xlu0 %v2131, 2
          %v2137 = vpop.permute.xlu0 %2136
          %v2140 = vmul.f32 %v2116, %v2135
          %v2141 = vmul.f32 %v2117, %v2137
          %2144 = vrot.lane.b32.xlu0 %v2140, 127
          %v2145 = vpop.permute.xlu0 %2144
          %2146 = vrot.lane.b32.xlu0 %v2141, 127
          %v2147 = vpop.permute.xlu0 %2146
          %v2150 = vrcp.pop %v2145
          %v2151 = vmul.f32 %v2128, %v2150
          %v2152 = vrcp.pop %v2147
          %v2153 = vmul.f32 %v2129, %v2152
          %v2154 = vrsqrt.pop %v2151
          %v2155 = vmul.f32 %v2151, %v2154
          %vm2156 = vcmp.eq.f32.partialorder %v2151, inf
          %v2157 = vsel %vm2156, %v2151, %v2155
          %vm2158 = vcmp.eq.f32.partialorder %v2151, 0.0
          %v2159 = vand.u32 %v2151, 2147483648
          %v2160 = vsel %vm2158, %v2159, %v2157
          %v2161 = vrsqrt.pop %v2153
          %v2162 = vmul.f32 %v2153, %v2161
          %vm2163 = vcmp.eq.f32.partialorder %v2153, inf
          %v2164 = vsel %vm2163, %v2153, %v2162
          %vm2165 = vcmp.eq.f32.partialorder %v2153, 0.0
          %v2166 = vand.u32 %v2153, 2147483648
          %v2167 = vsel %vm2165, %v2166, %v2164
          %2170 = vrot.lane.b32.xlu0 %v2160, 1
          %v2171 = vpop.permute.xlu0 %2170
          %2172 = vrot.lane.b32.xlu0 %v2167, 1
          %v2173 = vpop.permute.xlu0 %2172
          %vm2176 = vcmask 15360
          %v2177 = vsel %vm2176, %v1585, %v2171
          %v2178 = vsel %vm2176, %v1586, %v2173
          %2181 = vrot.lane.b32.xlu0 %v2075, 125
          %v2182 = vpop.permute.xlu0 %2181
          %2183 = vrot.lane.b32.xlu0 %v2077, 125
          %v2184 = vpop.permute.xlu0 %2183
          %2189 = vrot.lane.b32.xlu0 %v2116, 127
          %v2190 = vpop.permute.xlu0 %2189
          %2191 = vrot.lane.b32.xlu0 %v2117, 127
          %v2192 = vpop.permute.xlu0 %2191
          %2197 = vrot.lane.b32.xlu0 %v2096, 2
          %v2198 = vpop.permute.xlu0 %2197
          %2199 = vrot.lane.b32.xlu0 %v2097, 2
          %v2200 = vpop.permute.xlu0 %2199
          %2205 = vrot.lane.b32.xlu0 %v2094, 2
          %v2206 = vpop.permute.xlu0 %2205
          %2207 = vrot.lane.b32.xlu0 %v2095, 2
          %v2208 = vpop.permute.xlu0 %2207
          %2213 = vrot.lane.b32.xlu0 %v1585, 4
          %v2214 = vpop.permute.xlu0 %2213
          %2215 = vrot.lane.b32.xlu0 %v1586, 4
          %v2216 = vpop.permute.xlu0 %2215
          %2219 = vrot.lane.b32.xlu0 %v2160, 5
          %v2220 = vpop.permute.xlu0 %2219
          %2221 = vrot.lane.b32.xlu0 %v2167, 5
          %v2222 = vpop.permute.xlu0 %2221
          %2227 = vrot.lane.b32.xlu0 %v1103, 6
          %v2228 = vpop.permute.xlu0 %2227
          %2229 = vrot.lane.b32.xlu0 %v1104, 6
          %v2230 = vpop.permute.xlu0 %2229
          %vm2233 = vcmask 7168
          %v2234 = vsel %vm2233, %v2182, %v2190
          %v2235 = vsel %vm2233, %v2184, %v2192
          %v2236 = vsel %vm2176, %v2234, %v2198
          %v2237 = vsel %vm2176, %v2235, %v2200
          %v2238 = vsel %vm823, %v2236, %v2206
          %v2239 = vsel %vm823, %v2237, %v2208
          %v2240 = vsel %vm911, %v2238, %v2214
          %v2241 = vsel %vm911, %v2239, %v2216
          %vm2242 = vcmask 48128
          %v2243 = vsel %vm2242, %v2240, %v2220
          %v2244 = vsel %vm2242, %v2241, %v2222
          %vm2245 = vcmask 56320
          %v2246 = vsel %vm2245, %v2243, %v2228
          %v2247 = vsel %vm2245, %v2244, %v2230
          %s2248 = smul.u32 %s814, 16
          %s2249 = scalar_lea.vmem %s721, %s2248 [#allocation2]
          %2250 = vst.msk [vmem:[%s2249] sm:$0xff] %vm1211, %v2246
          %2251 = vst.msk [vmem:[%s2249 + $0x8] sm:$0xff] %vm1211, %v2247
          %s2252 = scalar_lea.vmem %s728, %s2248 [#allocation3]
          %2253 = vst.msk [vmem:[%s2252] sm:$0xff] %vm1113, %v1393
          %2254 = vst.msk [vmem:[%s2252 + $0x8] sm:$0xff] %vm1113, %v1395
          %s2255 = scalar_lea.vmem %s735, %s2248 [#allocation5]
          %2256 = vst.msk [vmem:[%s2255] sm:$0xff] %vm1113, %v1415
          %2257 = vst.msk [vmem:[%s2255 + $0x8] sm:$0xff] %vm1113, %v1417
        $region109: #{decoder_vis_forward.1} parent=103 // loop_footer
          %s818 = sadd.s32 1, %s814
        $region110: #{decoder_vis_forward.1} parent=103 // loop_footer_branch
          %813 = sbr.rel target = $region106
        $region111: #{decoder_vis_forward.1} parent=103 // loop_exit
          _
        %s2258 = sand.u32 %s500, 1
        %s2259 = sand.u32 %s500, 1
        %s2260 = smul.addr %s2259, 64
        %s2261 = scalar_lea.vmem [#allocation2], %s2260
        %s2262 = sand.u32 %s526, 1
        %s2263 = scalar_lea.sflag [#allocation4], %s2262
        %s2264 = sand.u32 %s526, 1
        %s2265 = smul.addr %s2264, 64
        %s2266 = scalar_lea.vmem [#allocation3], %s2265
        %s2267 = sand.u32 %s552, 1
        %s2268 = scalar_lea.sflag [#allocation6], %s2267
        %s2269 = sand.u32 %s552, 1
        %s2270 = smul.addr %s2269, 64
        %s2271 = scalar_lea.vmem [#allocation5], %s2270
        // Predicated region
        $region112: #{decoder_vis_forward.1} parent=103 // pred_check
          %p2272 = pneg %p510
        $region113: #{decoder_vis_forward.1} parent=103 // pred_check_branch
          %2274 = sbr.rel (%p2272) target = $region115
        $region114: #{decoder_vis_forward.1} parent=103 // pred_region
          %s2275 = smul.addr %s41, 2
          %s2276 = smul.addr %s2275, 8
          %s2277 = scalar_lea.vmem %s21, %s2276
          // Predicated region
          $region116: #{decoder_vis_forward.1} parent=114 // pred_check
            _
          $region117: #{decoder_vis_forward.1} parent=114 // pred_check_branch
            %2279 = sbr.rel (0) target = $region119
          $region118: #{decoder_vis_forward.1} parent=114 // pred_region
            // Predicated region
            $region120: #{decoder_vis_forward.1} parent=118 // pred_check
              _
            $region121: #{decoder_vis_forward.1} parent=118 // pred_check_branch
              %2281 = sbr.rel (0) target = $region123
            $region122: #{decoder_vis_forward.1} parent=118 // pred_region
              // Predicated region
              $region135: #{decoder_vis_forward.1} parent=122 // pred_check
                _
              $region136: #{decoder_vis_forward.1} parent=122 // pred_check_branch
                %2310 = sbr.rel (0) target = $region138
              $region137: #{decoder_vis_forward.1} parent=122 // pred_region
                loop: start=0, step=1, limit=1
                $region139: #{decoder_vis_forward.1} parent=137 // loop_pre_header
                  _
                $region140: #{decoder_vis_forward.1} parent=137 // loop_header
                  %s2312 = sphi 0, %s2316
                  %p2313 = scmp.ge.s32.totalorder %s2312, 1
                  %s2317 = sphi %s2261, %s2261
                  %s2318 = sphi %s2277, %s2277
                $region141: #{decoder_vis_forward.1} parent=137 // loop_header_branch
                  %2315 = sbr.rel (%p2313) target = $region145
                $region142: #{decoder_vis_forward.1} parent=137 // loop_body
                  %v2319 = vld [vmem:[%s2317] sm:$0xff]
                  %2320 = vst [vmem:[%s2318] sm:$0xff] %v2319
                  %v2321 = vld [vmem:[%s2317 + $0x8] sm:$0xff]
                  %2322 = vst [vmem:[%s2318 + $0x8] sm:$0xff] %v2321
                  %v2323 = vld [vmem:[%s2317 + $0x10] sm:$0xff]
                  %2324 = vst [vmem:[%s2318 + $0x20] sm:$0xff] %v2323
                  %v2325 = vld [vmem:[%s2317 + $0x18] sm:$0xff]
                  %2326 = vst [vmem:[%s2318 + $0x28] sm:$0xff] %v2325
                  %v2327 = vld [vmem:[%s2317 + $0x20] sm:$0xff]
                  %2328 = vst [vmem:[%s2318 + $0x40] sm:$0xff] %v2327
                  %v2329 = vld [vmem:[%s2317 + $0x28] sm:$0xff]
                  %2330 = vst [vmem:[%s2318 + $0x48] sm:$0xff] %v2329
                  %v2331 = vld [vmem:[%s2317 + $0x30] sm:$0xff]
                  %2332 = vst [vmem:[%s2318 + $0x60] sm:$0xff] %v2331
                  %v2333 = vld [vmem:[%s2317 + $0x38] sm:$0xff]
                  %2334 = vst [vmem:[%s2318 + $0x68] sm:$0xff] %v2333
                $region143: #{decoder_vis_forward.1} parent=137 // loop_footer
                  %s2316 = sadd.s32 1, %s2312
                $region144: #{decoder_vis_forward.1} parent=137 // loop_footer_branch
                  %2311 = sbr.rel target = $region140
                $region145: #{decoder_vis_forward.1} parent=137 // loop_exit
                  _
              $region138: #{decoder_vis_forward.1} parent=122 // pred_fallthru
                _
              // Predicated region
              $region146: #{decoder_vis_forward.1} parent=122 // pred_check
                _
              $region147: #{decoder_vis_forward.1} parent=122 // pred_check_branch
                %2336 = sbr.rel target = $region149
              $region148: #{decoder_vis_forward.1} parent=122 // pred_region
                _
              $region149: #{decoder_vis_forward.1} parent=122 // pred_fallthru
                _
            $region123: #{decoder_vis_forward.1} parent=118 // pred_fallthru
              _
            // Predicated region
            $region124: #{decoder_vis_forward.1} parent=118 // pred_check
              _
            $region125: #{decoder_vis_forward.1} parent=118 // pred_check_branch
              %2283 = sbr.rel target = $region127
            $region126: #{decoder_vis_forward.1} parent=118 // pred_region
              loop: start=0, step=1, limit=1
              $region128: #{decoder_vis_forward.1} parent=126 // loop_pre_header
                _
              $region129: #{decoder_vis_forward.1} parent=126 // loop_header
                %s2286 = sphi 0, %s2290
                %p2287 = scmp.ge.s32.totalorder %s2286, 1
                %s2291 = sphi %s2261, %s2261
                %s2292 = sphi %s2277, %s2277
              $region130: #{decoder_vis_forward.1} parent=126 // loop_header_branch
                %2289 = sbr.rel (%p2287) target = $region134
              $region131: #{decoder_vis_forward.1} parent=126 // loop_body
                %v2293 = vld [vmem:[%s2291] sm:$0xff]
                %2294 = vst [vmem:[%s2292] sm:$0xff] %v2293
                %v2295 = vld [vmem:[%s2291 + $0x8] sm:$0xff]
                %2296 = vst [vmem:[%s2292 + $0x8] sm:$0xff] %v2295
                %v2297 = vld [vmem:[%s2291 + $0x10] sm:$0xff]
                %2298 = vst [vmem:[%s2292 + $0x20] sm:$0xff] %v2297
                %v2299 = vld [vmem:[%s2291 + $0x18] sm:$0xff]
                %2300 = vst [vmem:[%s2292 + $0x28] sm:$0xff] %v2299
                %v2301 = vld [vmem:[%s2291 + $0x20] sm:$0xff]
                %2302 = vst [vmem:[%s2292 + $0x40] sm:$0xff] %v2301
                %v2303 = vld [vmem:[%s2291 + $0x28] sm:$0xff]
                %2304 = vst [vmem:[%s2292 + $0x48] sm:$0xff] %v2303
                %v2305 = vld [vmem:[%s2291 + $0x30] sm:$0xff]
                %2306 = vst [vmem:[%s2292 + $0x60] sm:$0xff] %v2305
                %v2307 = vld [vmem:[%s2291 + $0x38] sm:$0xff]
                %2308 = vst [vmem:[%s2292 + $0x68] sm:$0xff] %v2307
              $region132: #{decoder_vis_forward.1} parent=126 // loop_footer
                %s2290 = sadd.s32 1, %s2286
              $region133: #{decoder_vis_forward.1} parent=126 // loop_footer_branch
                %2285 = sbr.rel target = $region129
              $region134: #{decoder_vis_forward.1} parent=126 // loop_exit
                _
            $region127: #{decoder_vis_forward.1} parent=118 // pred_fallthru
              _
          $region119: #{decoder_vis_forward.1} parent=114 // pred_fallthru
            _
          %2337 = vnop
        $region115: #{decoder_vis_forward.1} parent=103 // pred_fallthru
          _
        // Predicated region
        $region150: #{decoder_vis_forward.1} parent=103 // pred_check
          %p2338 = pneg %p536
        $region151: #{decoder_vis_forward.1} parent=103 // pred_check_branch
          %2340 = sbr.rel (%p2338) target = $region153
        $region152: #{decoder_vis_forward.1} parent=103 // pred_region
          #allocation8 [shape = 'u32[6]{0}', space=smem, size = 0x18, scoped, tag = 'DMA stride descriptor']
          %s2342 = ssub.s32 1024, 1024
          %2343 = vsyncadd %s2263, %s2342
          %s2344 = smul.addr %s41, 2
          %s2345 = smul.addr %s2344, 128
          %s2346 = scalar_lea.hbm %s22, %s2345
          %s2348 = sshll.u32 1, 14
          %s2349 = sxor.u32 4294967295, %s2348
          %s2352 = sshll.u32 7, 18
          %s2353 = sxor.u32 4294967295, %s2352
          %s2354 = sand.u32 0, %s2353
          %s2356 = sor.u32 %s2354, 0
          %s2358 = sshll.u32 3, 24
          %s2359 = sxor.u32 4294967295, %s2358
          %s2360 = sand.u32 %s2356, %s2359
          %s2362 = sor.u32 %s2360, 0
          %s2363 = sshll.u32 %s2266, 4
          %s2364 = int_to_ptr.vmem [resolvable:$true] %s2363
          %2370 = sst [smem:[#allocation8]] 256
          %s2371 = scalar_lea.smem [#allocation8], 1
          %2372 = sst [smem:[%s2371]] 512
          %s2373 = scalar_lea.smem [#allocation8], 2
          %2374 = sst [smem:[%s2373]] 2
          %s2375 = scalar_lea.smem [#allocation8], 3
          %2376 = sst [smem:[%s2375]] 128
          %s2377 = scalar_lea.smem [#allocation8], 4
          %2378 = sst [smem:[%s2377]] 128
          %s2379 = scalar_lea.smem [#allocation8], 5
          %2380 = sst [smem:[%s2379]] 8
          %2382 = dma.general %s2364, 1024, %s2346, %s2263, [#allocation7], [#allocation8], %s2362, 0
        $region153: #{decoder_vis_forward.1} parent=103 // pred_fallthru
          _
        // Predicated region
        $region154: #{decoder_vis_forward.1} parent=103 // pred_check
          %p2383 = pneg %p562
        $region155: #{decoder_vis_forward.1} parent=103 // pred_check_branch
          %2385 = sbr.rel (%p2383) target = $region157
        $region156: #{decoder_vis_forward.1} parent=103 // pred_region
          #allocation10 [shape = 'u32[6]{0}', space=smem, size = 0x18, scoped, tag = 'DMA stride descriptor']
          %s2387 = ssub.s32 1024, 1024
          %2388 = vsyncadd %s2268, %s2387
          %s2389 = smul.addr %s41, 2
          %s2390 = smul.addr %s2389, 128
          %s2391 = scalar_lea.hbm %s23, %s2390
          %s2393 = sshll.u32 1, 14
          %s2394 = sxor.u32 4294967295, %s2393
          %s2397 = sshll.u32 7, 18
          %s2398 = sxor.u32 4294967295, %s2397
          %s2399 = sand.u32 0, %s2398
          %s2401 = sor.u32 %s2399, 0
          %s2403 = sshll.u32 3, 24
          %s2404 = sxor.u32 4294967295, %s2403
          %s2405 = sand.u32 %s2401, %s2404
          %s2407 = sor.u32 %s2405, 0
          %s2408 = sshll.u32 %s2271, 4
          %s2409 = int_to_ptr.vmem [resolvable:$true] %s2408
          %2415 = sst [smem:[#allocation10]] 256
          %s2416 = scalar_lea.smem [#allocation10], 1
          %2417 = sst [smem:[%s2416]] 512
          %s2418 = scalar_lea.smem [#allocation10], 2
          %2419 = sst [smem:[%s2418]] 2
          %s2420 = scalar_lea.smem [#allocation10], 3
          %2421 = sst [smem:[%s2420]] 128
          %s2422 = scalar_lea.smem [#allocation10], 4
          %2423 = sst [smem:[%s2422]] 128
          %s2424 = scalar_lea.smem [#allocation10], 5
          %2425 = sst [smem:[%s2424]] 8
          %2427 = dma.general %s2409, 1024, %s2391, %s2268, [#allocation9], [#allocation10], %s2407, 0
        $region157: #{decoder_vis_forward.1} parent=103 // pred_fallthru
          _
      $region104: #{decoder_vis_forward.1} parent=5 // pred_fallthru
        _
      %p2428 = scmp.le.s32.totalorder 2, %s36
      // Predicated region
      $region158: #{decoder_vis_forward.1} parent=5 // pred_check
        %p2429 = pneg %p2428
      $region159: #{decoder_vis_forward.1} parent=5 // pred_check_branch
        %2431 = sbr.rel (%p2429) target = $region161
      $region160: #{decoder_vis_forward.1} parent=5 // pred_region
        %s2432 = ssub.s32 %s36, 2
        // Predicated region
        $region162: #{decoder_vis_forward.1} parent=160 // pred_check
          %p2433 = pneg %p516
        $region163: #{decoder_vis_forward.1} parent=160 // pred_check_branch
          %2435 = sbr.rel (%p2433) target = $region165
        $region164: #{decoder_vis_forward.1} parent=160 // pred_region
          %s2436 = sand.u32 %s501, 1
          %s2437 = sand.u32 %s501, 1
          %s2438 = smul.addr %s2437, 64
          %s2439 = scalar_lea.vmem [#allocation2], %s2438
        $region165: #{decoder_vis_forward.1} parent=160 // pred_fallthru
          _
        // Predicated region
        $region166: #{decoder_vis_forward.1} parent=160 // pred_check
          %p2440 = pneg %p542
        $region167: #{decoder_vis_forward.1} parent=160 // pred_check_branch
          %2442 = sbr.rel (%p2440) target = $region169
        $region168: #{decoder_vis_forward.1} parent=160 // pred_region
          %s2443 = sand.u32 %s527, 1
          %s2444 = scalar_lea.sflag [#allocation4], %s2443
          %s2445 = sand.u32 %s527, 1
          %s2446 = smul.addr %s2445, 64
          %s2447 = scalar_lea.vmem [#allocation3], %s2446
          %2448 = dma.done %s2444, 1024
        $region169: #{decoder_vis_forward.1} parent=160 // pred_fallthru
          _
        // Predicated region
        $region170: #{decoder_vis_forward.1} parent=160 // pred_check
          %p2449 = pneg %p568
        $region171: #{decoder_vis_forward.1} parent=160 // pred_check_branch
          %2451 = sbr.rel (%p2449) target = $region173
        $region172: #{decoder_vis_forward.1} parent=160 // pred_region
          %s2452 = sand.u32 %s553, 1
          %s2453 = scalar_lea.sflag [#allocation6], %s2452
          %s2454 = sand.u32 %s553, 1
          %s2455 = smul.addr %s2454, 64
          %s2456 = scalar_lea.vmem [#allocation5], %s2455
          %2457 = dma.done %s2453, 1024
        $region173: #{decoder_vis_forward.1} parent=160 // pred_fallthru
          _
      $region161: #{decoder_vis_forward.1} parent=5 // pred_fallthru
        _
    $region6: #{decoder_vis_forward.1} parent=1 // loop_footer
      %s40 = sadd.s32 1, %s36
    $region7: #{decoder_vis_forward.1} parent=1 // loop_footer_branch
      %35 = sbr.rel target = $region3
    $region8: #{decoder_vis_forward.1} parent=1 // loop_exit
      _
    %2458 = vsyncpa [#allocation4], 1
    %s2459 = scalar_lea.sflag [#allocation4], 1
    %2460 = vsyncpa %s2459, 1
    %2461 = vsyncpa [#allocation6], 1
    %s2462 = scalar_lea.sflag [#allocation6], 1
    %2463 = vsyncpa %s2462, 1

</llo_original>
